<compile_context>
chip_gen: v7x
topology: tpu7x:2x2x1
jax: 0.10.0
libtpu: 0.0.40
codegen_flags: <defaults>
</compile_context>

<pallas_src>
import functools

import jax
import jax.numpy as jnp
from jax.experimental import pallas as pl
from jax.experimental.pallas import tpu as pltpu

_OUT_LANES = 128  # lane-dense width of the padded FC output slab


# ----------------------------- Pallas kernel ------------------------------- #

def _make_fused_lstm_kernel(num_layers: int, T: int, Bp: int, H: int, compute_dtype):
    """Fused LSTM wavefront + FC head.

    Ref order: x_flat, w_ih0_t, w_blk, bias_all, fc_w_pad, fc_b_pad, out, zx_scratch.
    """
    G = 4 * H

    def kernel(x_ref, wih0_ref, wblk_ref, bias_ref, wfc_ref, bfc_ref, out_ref, zx_ref):
        # Hoisted layer-0 input projection: one big MXU matmul over all T timesteps.
        zx_ref[...] = jnp.dot(
            x_ref[...].astype(compute_dtype),
            wih0_ref[...].astype(compute_dtype),
            preferred_element_type=jnp.float32,
        )                                                            # (T*Bp, 4H)

        wblk = wblk_ref[...].astype(compute_dtype)                   # (L*H, L*4H), loop-invariant
        bias = bias_ref[...]                                         # (1, L*4H)

        h = [jnp.zeros((Bp, H), jnp.float32) for _ in range(num_layers)]
        c = [jnp.zeros((Bp, H), jnp.float32) for _ in range(num_layers)]

        # Wavefront: tick s advances layer l to timestep t = s - l.  One block matmul per
        # tick covers every layer's recurrent + inter-layer projection simultaneously.
        for s in range(T + num_layers - 1):
            lhs = h[0] if num_layers == 1 else jnp.concatenate(h, axis=1)    # (Bp, L*H)
            r = jnp.dot(lhs.astype(compute_dtype), wblk,
                        preferred_element_type=jnp.float32) + bias           # (Bp, L*4H)

            new_h = list(h)
            new_c = list(c)
            for l in range(num_layers):
                t = s - l
                if 0 <= t < T:                                       # static: dead ticks emit no code
                    z = r[:, l * G:(l + 1) * G]                      # (Bp, 4H)
                    if l == 0:
                        z = z + zx_ref[t * Bp:(t + 1) * Bp, :]
                    # Full-vreg activations: sigmoid(x) = 0.5*(tanh(x/2)+1) for i/f/o,
                    # tanh for g — 2 full-width EUP ops instead of 4+2 partial ones.
                    sig = 0.5 * (jnp.tanh(0.5 * z) + 1.0)
                    tnh = jnp.tanh(z)
                    i_g = sig[:, 0 * H:1 * H]
                    f_g = sig[:, 1 * H:2 * H]
                    g_g = tnh[:, 2 * H:3 * H]
                    o_g = sig[:, 3 * H:4 * H]
                    c_new = f_g * c[l] + i_g * g_g
                    new_c[l] = c_new
                    new_h[l] = o_g * jnp.tanh(c_new)
            h, c = new_h, new_c

        # Final Linear(hidden_size, 1), padded to 128 lanes -> single lane-dense store.
        out_ref[...] = (jnp.dot(h[-1], wfc_ref[...],
                                preferred_element_type=jnp.float32) + bfc_ref[...])

    return kernel


# ------------------------------ JAX wrapper -------------------------------- #

@functools.partial(jax.jit, static_argnames=("use_bf16",))
def lstm_forward(x_bti, params, use_bf16=False):
    """Full LSTM.forward: x (B, T, I) -> (B, 1)."""
    B, T, I = x_bti.shape
    layers = params["lstm"]
    L = len(layers)
    H = layers[0]["w_hh_t"].shape[0]
    G = 4 * H
    Bp = ((B + 7) // 8) * 8                       # pad batch to a full sublane tile
    compute_dtype = jnp.bfloat16 if use_bf16 else jnp.float32

    # time-major, batch-padded, flattened to (T*Bp, I) so the hoisted projection is 2-D.
    x_tbi = jnp.transpose(x_bti, (1, 0, 2)).astype(jnp.float32)       # (T, B, I)
    x_pad = jnp.zeros((T, Bp, I), jnp.float32).at[:, :B, :].set(x_tbi)
    x_flat = x_pad.reshape(T * Bp, I)

    # Block recurrent weight for the layer wavefront (built once, wrapper-side):
    #   [[Whh_0, Wih_1, 0    , ...],
    #    [0    , Whh_1, Wih_2, ...],
    #    [0    , 0    , Whh_2, ...]]      shape (L*H, L*4H)
    w_blk = jnp.zeros((L * H, L * G), jnp.float32)
    for l, layer in enumerate(layers):
        w_blk = w_blk.at[l * H:(l + 1) * H, l * G:(l + 1) * G].set(layer["w_hh_t"])
        if l >= 1:
            w_blk = w_blk.at[(l - 1) * H:l * H, l * G:(l + 1) * G].set(layer["w_ih_t"])
    bias_all = jnp.concatenate([layer["bias"] for layer in layers], axis=1)   # (1, L*4H)

    # FC weights padded to a 128-lane output slab (column 0 holds the real output).
    wfc_pad = jnp.zeros((H, _OUT_LANES), jnp.float32).at[:, :1].set(params["fc_w_t"])
    bfc_pad = jnp.zeros((1, _OUT_LANES), jnp.float32).at[:, :1].set(params["fc_b"])

    vmem_spec = pl.BlockSpec(memory_space=pltpu.MemorySpace.VMEM)
    out_pad = pl.pallas_call(
        _make_fused_lstm_kernel(L, T, Bp, H, compute_dtype),
        out_shape=jax.ShapeDtypeStruct((Bp, _OUT_LANES), jnp.float32),
        in_specs=[vmem_spec] * 6,
        out_specs=vmem_spec,
        scratch_shapes=[
            pltpu.VMEM((T * Bp, G), jnp.float32),   # hoisted layer-0 input projection Zx
        ],
        compiler_params=pltpu.CompilerParams(vmem_limit_bytes=64 * 1024 * 1024),
    )(x_flat, layers[0]["w_ih_t"], w_blk, bias_all, wfc_pad, bfc_pad)
    return out_pad[:B, :1]


# --------------------------- deterministic init ----------------------------- #

def init_params(key, input_size, hidden_size, num_layers):
    """Mimics PyTorch's uniform(-1/sqrt(H), 1/sqrt(H)) init; deterministic from key."""
    bound = 1.0 / jnp.sqrt(jnp.asarray(hidden_size, jnp.float32))
    layers = []
    for l in range(num_layers):
        in_sz = input_size if l == 0 else hidden_size
        key, k1, k2, k3, k4 = jax.random.split(key, 5)
        w_ih = jax.random.uniform(k1, (4 * hidden_size, in_sz), jnp.float32, -bound, bound)
        w_hh = jax.random.uniform(k2, (4 * hidden_size, hidden_size), jnp.float32, -bound, bound)
        b_ih = jax.random.uniform(k3, (4 * hidden_size,), jnp.float32, -bound, bound)
        b_hh = jax.random.uniform(k4, (4 * hidden_size,), jnp.float32, -bound, bound)
        layers.append({
            "w_ih_t": w_ih.T,                               # (in, 4H)
            "w_hh_t": w_hh.T,                               # (H, 4H)
            "bias": (b_ih + b_hh).reshape(1, 4 * hidden_size),
        })
    key, kw, kb = jax.random.split(key, 3)
    fc_bound = 1.0 / jnp.sqrt(jnp.asarray(hidden_size, jnp.float32))
    fc_w = jax.random.uniform(kw, (1, hidden_size), jnp.float32, -fc_bound, fc_bound)
    fc_b = jax.random.uniform(kb, (1,), jnp.float32, -fc_bound, fc_bound)
    return {"lstm": layers, "fc_w_t": fc_w.T, "fc_b": fc_b.reshape(1, 1)}


# ------------------------------ pure-JAX ref -------------------------------- #

def lstm_forward_ref(x_bti, params):
    h_seq = jnp.transpose(x_bti, (1, 0, 2)).astype(jnp.float32)
    for layer in params["lstm"]:
        _, B, _ = h_seq.shape
        H = layer["w_hh_t"].shape[0]
        h = jnp.zeros((B, H), jnp.float32)
        c = jnp.zeros((B, H), jnp.float32)

        def step(carry, x_t, layer=layer, H=H):
            h, c = carry
            z = x_t @ layer["w_ih_t"] + h @ layer["w_hh_t"] + layer["bias"]
            i = jax.nn.sigmoid(z[:, :H])
            f = jax.nn.sigmoid(z[:, H:2 * H])
            g = jnp.tanh(z[:, 2 * H:3 * H])
            o = jax.nn.sigmoid(z[:, 3 * H:])
            c = f * c + i * g
            h = o * jnp.tanh(c)
            return (h, c), h

        (_, _), h_seq = jax.lax.scan(step, (h, c), h_seq)
    return h_seq[-1] @ params["fc_w_t"] + params["fc_b"]


# ----------------------------------- main ----------------------------------- #

if __name__ == "__main__":
    batch, seq, input_size, hidden_size, num_layers = 2, 8, 4, 32, 2

    key = jax.random.PRNGKey(0)
    k_x, k_p = jax.random.split(key)
    x = jax.random.normal(k_x, (batch, seq, input_size), jnp.float32)
    params = init_params(k_p, input_size, hidden_size, num_layers)

    out = jax.block_until_ready(lstm_forward(x, params))

    ref = lstm_forward_ref(x, params)
    assert out.shape == (batch, 1)
    assert jnp.allclose(out, ref, atol=1e-5, rtol=1e-5), (out, ref)

    # TODO(synk): training utilities (Adam, MSELoss, train/validate loops) are out of scope
    # for a forward-pass kernel.
    print("KERNEL_OK")
</pallas_src>

<mosaic_0001>
module attributes {stable_mosaic.version = 11 : i64} {
  func.func @kernel(%arg0: memref<64x4xf32, #tpu.memory_space<vmem>>, %arg1: memref<4x128xf32, #tpu.memory_space<vmem>>, %arg2: memref<64x256xf32, #tpu.memory_space<vmem>>, %arg3: memref<1x256xf32, #tpu.memory_space<vmem>>, %arg4: memref<32x128xf32, #tpu.memory_space<vmem>>, %arg5: memref<1x128xf32, #tpu.memory_space<vmem>>, %arg6: memref<8x128xf32, #tpu.memory_space<vmem>>, %arg7: memref<64x128xf32, #tpu.memory_space<vmem>>) attributes {dimension_semantics = [], scalar_prefetch = 0 : i64, scratch_operands = 1 : i64, tpu.core_type = #tpu.core_type<tc>} {
    %c0 = arith.constant 0 : index
    %c0_0 = arith.constant 0 : index
    %0 = vector.load %arg0[%c0, %c0_0] : memref<64x4xf32, #tpu.memory_space<vmem>>, vector<64x4xf32>
    %c0_1 = arith.constant 0 : index
    %c0_2 = arith.constant 0 : index
    %1 = vector.load %arg1[%c0_1, %c0_2] : memref<4x128xf32, #tpu.memory_space<vmem>>, vector<4x128xf32>
    %cst = arith.constant dense<0.000000e+00> : vector<64x128xf32>
    %2 = tpu.matmul %0, %1, %cst {dimension_numbers = #tpu.dot_dimension_numbers<[1], [0], [0], [1], [0, 0, 1, 1], [], []>} : vector<64x4xf32>, vector<4x128xf32>, vector<64x128xf32> -> vector<64x128xf32>
    %c0_3 = arith.constant 0 : index
    %c0_4 = arith.constant 0 : index
    %3 = vector.load %arg7[%c0_3, %c0_4] : memref<64x128xf32, #tpu.memory_space<vmem>>, vector<64x128xf32>
    tpu.vector_store %arg7[%c0_3, %c0_4], %2 {strides = array<i32>} : memref<64x128xf32, #tpu.memory_space<vmem>>, vector<64x128xf32>,
    %c0_5 = arith.constant 0 : index
    %c0_6 = arith.constant 0 : index
    %4 = vector.load %arg2[%c0_5, %c0_6] : memref<64x256xf32, #tpu.memory_space<vmem>>, vector<64x256xf32>
    %c0_7 = arith.constant 0 : index
    %c0_8 = arith.constant 0 : index
    %5 = vector.load %arg3[%c0_7, %c0_8] : memref<1x256xf32, #tpu.memory_space<vmem>>, vector<1x256xf32>
    %cst_9 = arith.constant 0.000000e+00 : f32
    %6 = vector.broadcast %cst_9 : f32 to vector<8x32xf32>
    %cst_10 = arith.constant 0.000000e+00 : f32
    %7 = vector.broadcast %cst_10 : f32 to vector<8x32xf32>
    %cst_11 = arith.constant 0.000000e+00 : f32
    %8 = vector.broadcast %cst_11 : f32 to vector<8x32xf32>
    %cst_12 = arith.constant 0.000000e+00 : f32
    %9 = vector.broadcast %cst_12 : f32 to vector<8x32xf32>
    %10 = tpu.concatenate %6, %7 in 1 : vector<8x32xf32>, vector<8x32xf32> -> vector<8x64xf32>
    %cst_13 = arith.constant dense<0.000000e+00> : vector<8x256xf32>
    %11 = tpu.matmul %10, %4, %cst_13 {dimension_numbers = #tpu.dot_dimension_numbers<[1], [0], [0], [1], [0, 0, 1, 1], [], []>} : vector<8x64xf32>, vector<64x256xf32>, vector<8x256xf32> -> vector<8x256xf32>
    %12 = vector.broadcast %5 : vector<1x256xf32> to vector<8x256xf32>
    %13 = arith.addf %11, %12 : vector<8x256xf32>
    %14 = vector.extract_strided_slice %13 {offsets = [0, 0], sizes = [8, 128], strides = [1, 1]} : vector<8x256xf32> to vector<8x128xf32>
    %c0_14 = arith.constant 0 : index
    %c0_15 = arith.constant 0 : index
    %15 = vector.load %arg7[%c0_14, %c0_15] : memref<64x128xf32, #tpu.memory_space<vmem>>, vector<8x128xf32>
    %16 = arith.addf %14, %15 : vector<8x128xf32>
    %cst_16 = arith.constant 5.000000e-01 : f32
    %17 = vector.broadcast %cst_16 : f32 to vector<8x128xf32>
    %18 = arith.mulf %17, %16 : vector<8x128xf32>
    %19 = math.tanh %18 : vector<8x128xf32>
    %cst_17 = arith.constant 1.000000e+00 : f32
    %20 = vector.broadcast %cst_17 : f32 to vector<8x128xf32>
    %21 = arith.addf %19, %20 : vector<8x128xf32>
    %cst_18 = arith.constant 5.000000e-01 : f32
    %22 = vector.broadcast %cst_18 : f32 to vector<8x128xf32>
    %23 = arith.mulf %22, %21 : vector<8x128xf32>
    %24 = math.tanh %16 : vector<8x128xf32>
    %25 = vector.extract_strided_slice %23 {offsets = [0, 0], sizes = [8, 32], strides = [1, 1]} : vector<8x128xf32> to vector<8x32xf32>
    %26 = vector.extract_strided_slice %23 {offsets = [0, 32], sizes = [8, 32], strides = [1, 1]} : vector<8x128xf32> to vector<8x32xf32>
    %27 = vector.extract_strided_slice %24 {offsets = [0, 64], sizes = [8, 32], strides = [1, 1]} : vector<8x128xf32> to vector<8x32xf32>
    %28 = vector.extract_strided_slice %23 {offsets = [0, 96], sizes = [8, 32], strides = [1, 1]} : vector<8x128xf32> to vector<8x32xf32>
    %29 = arith.mulf %26, %8 : vector<8x32xf32>
    %30 = arith.mulf %25, %27 : vector<8x32xf32>
    %31 = arith.addf %29, %30 : vector<8x32xf32>
    %32 = math.tanh %31 : vector<8x32xf32>
    %33 = arith.mulf %28, %32 : vector<8x32xf32>
    %34 = tpu.concatenate %33, %7 in 1 : vector<8x32xf32>, vector<8x32xf32> -> vector<8x64xf32>
    %cst_19 = arith.constant dense<0.000000e+00> : vector<8x256xf32>
    %35 = tpu.matmul %34, %4, %cst_19 {dimension_numbers = #tpu.dot_dimension_numbers<[1], [0], [0], [1], [0, 0, 1, 1], [], []>} : vector<8x64xf32>, vector<64x256xf32>, vector<8x256xf32> -> vector<8x256xf32>
    %36 = vector.broadcast %5 : vector<1x256xf32> to vector<8x256xf32>
    %37 = arith.addf %35, %36 : vector<8x256xf32>
    %38 = vector.extract_strided_slice %37 {offsets = [0, 0], sizes = [8, 128], strides = [1, 1]} : vector<8x256xf32> to vector<8x128xf32>
    %c8 = arith.constant 8 : index
    %c0_20 = arith.constant 0 : index
    %39 = vector.load %arg7[%c8, %c0_20] : memref<64x128xf32, #tpu.memory_space<vmem>>, vector<8x128xf32>
    %40 = arith.addf %38, %39 : vector<8x128xf32>
    %cst_21 = arith.constant 5.000000e-01 : f32
    %41 = vector.broadcast %cst_21 : f32 to vector<8x128xf32>
    %42 = arith.mulf %41, %40 : vector<8x128xf32>
    %43 = math.tanh %42 : vector<8x128xf32>
    %cst_22 = arith.constant 1.000000e+00 : f32
    %44 = vector.broadcast %cst_22 : f32 to vector<8x128xf32>
    %45 = arith.addf %43, %44 : vector<8x128xf32>
    %cst_23 = arith.constant 5.000000e-01 : f32
    %46 = vector.broadcast %cst_23 : f32 to vector<8x128xf32>
    %47 = arith.mulf %46, %45 : vector<8x128xf32>
    %48 = math.tanh %40 : vector<8x128xf32>
    %49 = vector.extract_strided_slice %47 {offsets = [0, 0], sizes = [8, 32], strides = [1, 1]} : vector<8x128xf32> to vector<8x32xf32>
    %50 = vector.extract_strided_slice %47 {offsets = [0, 32], sizes = [8, 32], strides = [1, 1]} : vector<8x128xf32> to vector<8x32xf32>
    %51 = vector.extract_strided_slice %48 {offsets = [0, 64], sizes = [8, 32], strides = [1, 1]} : vector<8x128xf32> to vector<8x32xf32>
    %52 = vector.extract_strided_slice %47 {offsets = [0, 96], sizes = [8, 32], strides = [1, 1]} : vector<8x128xf32> to vector<8x32xf32>
    %53 = arith.mulf %50, %31 : vector<8x32xf32>
    %54 = arith.mulf %49, %51 : vector<8x32xf32>
    %55 = arith.addf %53, %54 : vector<8x32xf32>
    %56 = math.tanh %55 : vector<8x32xf32>
    %57 = arith.mulf %52, %56 : vector<8x32xf32>
    %58 = vector.extract_strided_slice %37 {offsets = [0, 128], sizes = [8, 128], strides = [1, 1]} : vector<8x256xf32> to vector<8x128xf32>
    %cst_24 = arith.constant 5.000000e-01 : f32
    %59 = vector.broadcast %cst_24 : f32 to vector<8x128xf32>
    %60 = arith.mulf %59, %58 : vector<8x128xf32>
    %61 = math.tanh %60 : vector<8x128xf32>
    %cst_25 = arith.constant 1.000000e+00 : f32
    %62 = vector.broadcast %cst_25 : f32 to vector<8x128xf32>
    %63 = arith.addf %61, %62 : vector<8x128xf32>
    %cst_26 = arith.constant 5.000000e-01 : f32
    %64 = vector.broadcast %cst_26 : f32 to vector<8x128xf32>
    %65 = arith.mulf %64, %63 : vector<8x128xf32>
    %66 = math.tanh %58 : vector<8x128xf32>
    %67 = vector.extract_strided_slice %65 {offsets = [0, 0], sizes = [8, 32], strides = [1, 1]} : vector<8x128xf32> to vector<8x32xf32>
    %68 = vector.extract_strided_slice %65 {offsets = [0, 32], sizes = [8, 32], strides = [1, 1]} : vector<8x128xf32> to vector<8x32xf32>
    %69 = vector.extract_strided_slice %66 {offsets = [0, 64], sizes = [8, 32], strides = [1, 1]} : vector<8x128xf32> to vector<8x32xf32>
    %70 = vector.extract_strided_slice %65 {offsets = [0, 96], sizes = [8, 32], strides = [1, 1]} : vector<8x128xf32> to vector<8x32xf32>
    %71 = arith.mulf %68, %9 : vector<8x32xf32>
    %72 = arith.mulf %67, %69 : vector<8x32xf32>
    %73 = arith.addf %71, %72 : vector<8x32xf32>
    %74 = math.tanh %73 : vector<8x32xf32>
    %75 = arith.mulf %70, %74 : vector<8x32xf32>
    %76 = tpu.concatenate %57, %75 in 1 : vector<8x32xf32>, vector<8x32xf32> -> vector<8x64xf32>
    %cst_27 = arith.constant dense<0.000000e+00> : vector<8x256xf32>
    %77 = tpu.matmul %76, %4, %cst_27 {dimension_numbers = #tpu.dot_dimension_numbers<[1], [0], [0], [1], [0, 0, 1, 1], [], []>} : vector<8x64xf32>, vector<64x256xf32>, vector<8x256xf32> -> vector<8x256xf32>
    %78 = vector.broadcast %5 : vector<1x256xf32> to vector<8x256xf32>
    %79 = arith.addf %77, %78 : vector<8x256xf32>
    %80 = vector.extract_strided_slice %79 {offsets = [0, 0], sizes = [8, 128], strides = [1, 1]} : vector<8x256xf32> to vector<8x128xf32>
    %c16 = arith.constant 16 : index
    %c0_28 = arith.constant 0 : index
    %81 = vector.load %arg7[%c16, %c0_28] : memref<64x128xf32, #tpu.memory_space<vmem>>, vector<8x128xf32>
    %82 = arith.addf %80, %81 : vector<8x128xf32>
    %cst_29 = arith.constant 5.000000e-01 : f32
    %83 = vector.broadcast %cst_29 : f32 to vector<8x128xf32>
    %84 = arith.mulf %83, %82 : vector<8x128xf32>
    %85 = math.tanh %84 : vector<8x128xf32>
    %cst_30 = arith.constant 1.000000e+00 : f32
    %86 = vector.broadcast %cst_30 : f32 to vector<8x128xf32>
    %87 = arith.addf %85, %86 : vector<8x128xf32>
    %cst_31 = arith.constant 5.000000e-01 : f32
    %88 = vector.broadcast %cst_31 : f32 to vector<8x128xf32>
    %89 = arith.mulf %88, %87 : vector<8x128xf32>
    %90 = math.tanh %82 : vector<8x128xf32>
    %91 = vector.extract_strided_slice %89 {offsets = [0, 0], sizes = [8, 32], strides = [1, 1]} : vector<8x128xf32> to vector<8x32xf32>
    %92 = vector.extract_strided_slice %89 {offsets = [0, 32], sizes = [8, 32], strides = [1, 1]} : vector<8x128xf32> to vector<8x32xf32>
    %93 = vector.extract_strided_slice %90 {offsets = [0, 64], sizes = [8, 32], strides = [1, 1]} : vector<8x128xf32> to vector<8x32xf32>
    %94 = vector.extract_strided_slice %89 {offsets = [0, 96], sizes = [8, 32], strides = [1, 1]} : vector<8x128xf32> to vector<8x32xf32>
    %95 = arith.mulf %92, %55 : vector<8x32xf32>
    %96 = arith.mulf %91, %93 : vector<8x32xf32>
    %97 = arith.addf %95, %96 : vector<8x32xf32>
    %98 = math.tanh %97 : vector<8x32xf32>
    %99 = arith.mulf %94, %98 : vector<8x32xf32>
    %100 = vector.extract_strided_slice %79 {offsets = [0, 128], sizes = [8, 128], strides = [1, 1]} : vector<8x256xf32> to vector<8x128xf32>
    %cst_32 = arith.constant 5.000000e-01 : f32
    %101 = vector.broadcast %cst_32 : f32 to vector<8x128xf32>
    %102 = arith.mulf %101, %100 : vector<8x128xf32>
    %103 = math.tanh %102 : vector<8x128xf32>
    %cst_33 = arith.constant 1.000000e+00 : f32
    %104 = vector.broadcast %cst_33 : f32 to vector<8x128xf32>
    %105 = arith.addf %103, %104 : vector<8x128xf32>
    %cst_34 = arith.constant 5.000000e-01 : f32
    %106 = vector.broadcast %cst_34 : f32 to vector<8x128xf32>
    %107 = arith.mulf %106, %105 : vector<8x128xf32>
    %108 = math.tanh %100 : vector<8x128xf32>
    %109 = vector.extract_strided_slice %107 {offsets = [0, 0], sizes = [8, 32], strides = [1, 1]} : vector<8x128xf32> to vector<8x32xf32>
    %110 = vector.extract_strided_slice %107 {offsets = [0, 32], sizes = [8, 32], strides = [1, 1]} : vector<8x128xf32> to vector<8x32xf32>
    %111 = vector.extract_strided_slice %108 {offsets = [0, 64], sizes = [8, 32], strides = [1, 1]} : vector<8x128xf32> to vector<8x32xf32>
    %112 = vector.extract_strided_slice %107 {offsets = [0, 96], sizes = [8, 32], strides = [1, 1]} : vector<8x128xf32> to vector<8x32xf32>
    %113 = arith.mulf %110, %73 : vector<8x32xf32>
    %114 = arith.mulf %109, %111 : vector<8x32xf32>
    %115 = arith.addf %113, %114 : vector<8x32xf32>
    %116 = math.tanh %115 : vector<8x32xf32>
    %117 = arith.mulf %112, %116 : vector<8x32xf32>
    %118 = tpu.concatenate %99, %117 in 1 : vector<8x32xf32>, vector<8x32xf32> -> vector<8x64xf32>
    %cst_35 = arith.constant dense<0.000000e+00> : vector<8x256xf32>
    %119 = tpu.matmul %118, %4, %cst_35 {dimension_numbers = #tpu.dot_dimension_numbers<[1], [0], [0], [1], [0, 0, 1, 1], [], []>} : vector<8x64xf32>, vector<64x256xf32>, vector<8x256xf32> -> vector<8x256xf32>
    %120 = vector.broadcast %5 : vector<1x256xf32> to vector<8x256xf32>
    %121 = arith.addf %119, %120 : vector<8x256xf32>
    %122 = vector.extract_strided_slice %121 {offsets = [0, 0], sizes = [8, 128], strides = [1, 1]} : vector<8x256xf32> to vector<8x128xf32>
    %c24 = arith.constant 24 : index
    %c0_36 = arith.constant 0 : index
    %123 = vector.load %arg7[%c24, %c0_36] : memref<64x128xf32, #tpu.memory_space<vmem>>, vector<8x128xf32>
    %124 = arith.addf %122, %123 : vector<8x128xf32>
    %cst_37 = arith.constant 5.000000e-01 : f32
    %125 = vector.broadcast %cst_37 : f32 to vector<8x128xf32>
    %126 = arith.mulf %125, %124 : vector<8x128xf32>
    %127 = math.tanh %126 : vector<8x128xf32>
    %cst_38 = arith.constant 1.000000e+00 : f32
    %128 = vector.broadcast %cst_38 : f32 to vector<8x128xf32>
    %129 = arith.addf %127, %128 : vector<8x128xf32>
    %cst_39 = arith.constant 5.000000e-01 : f32
    %130 = vector.broadcast %cst_39 : f32 to vector<8x128xf32>
    %131 = arith.mulf %130, %129 : vector<8x128xf32>
    %132 = math.tanh %124 : vector<8x128xf32>
    %133 = vector.extract_strided_slice %131 {offsets = [0, 0], sizes = [8, 32], strides = [1, 1]} : vector<8x128xf32> to vector<8x32xf32>
    %134 = vector.extract_strided_slice %131 {offsets = [0, 32], sizes = [8, 32], strides = [1, 1]} : vector<8x128xf32> to vector<8x32xf32>
    %135 = vector.extract_strided_slice %132 {offsets = [0, 64], sizes = [8, 32], strides = [1, 1]} : vector<8x128xf32> to vector<8x32xf32>
    %136 = vector.extract_strided_slice %131 {offsets = [0, 96], sizes = [8, 32], strides = [1, 1]} : vector<8x128xf32> to vector<8x32xf32>
    %137 = arith.mulf %134, %97 : vector<8x32xf32>
    %138 = arith.mulf %133, %135 : vector<8x32xf32>
    %139 = arith.addf %137, %138 : vector<8x32xf32>
    %140 = math.tanh %139 : vector<8x32xf32>
    %141 = arith.mulf %136, %140 : vector<8x32xf32>
    %142 = vector.extract_strided_slice %121 {offsets = [0, 128], sizes = [8, 128], strides = [1, 1]} : vector<8x256xf32> to vector<8x128xf32>
    %cst_40 = arith.constant 5.000000e-01 : f32
    %143 = vector.broadcast %cst_40 : f32 to vector<8x128xf32>
    %144 = arith.mulf %143, %142 : vector<8x128xf32>
    %145 = math.tanh %144 : vector<8x128xf32>
    %cst_41 = arith.constant 1.000000e+00 : f32
    %146 = vector.broadcast %cst_41 : f32 to vector<8x128xf32>
    %147 = arith.addf %145, %146 : vector<8x128xf32>
    %cst_42 = arith.constant 5.000000e-01 : f32
    %148 = vector.broadcast %cst_42 : f32 to vector<8x128xf32>
    %149 = arith.mulf %148, %147 : vector<8x128xf32>
    %150 = math.tanh %142 : vector<8x128xf32>
    %151 = vector.extract_strided_slice %149 {offsets = [0, 0], sizes = [8, 32], strides = [1, 1]} : vector<8x128xf32> to vector<8x32xf32>
    %152 = vector.extract_strided_slice %149 {offsets = [0, 32], sizes = [8, 32], strides = [1, 1]} : vector<8x128xf32> to vector<8x32xf32>
    %153 = vector.extract_strided_slice %150 {offsets = [0, 64], sizes = [8, 32], strides = [1, 1]} : vector<8x128xf32> to vector<8x32xf32>
    %154 = vector.extract_strided_slice %149 {offsets = [0, 96], sizes = [8, 32], strides = [1, 1]} : vector<8x128xf32> to vector<8x32xf32>
    %155 = arith.mulf %152, %115 : vector<8x32xf32>
    %156 = arith.mulf %151, %153 : vector<8x32xf32>
    %157 = arith.addf %155, %156 : vector<8x32xf32>
    %158 = math.tanh %157 : vector<8x32xf32>
    %159 = arith.mulf %154, %158 : vector<8x32xf32>
    %160 = tpu.concatenate %141, %159 in 1 : vector<8x32xf32>, vector<8x32xf32> -> vector<8x64xf32>
    %cst_43 = arith.constant dense<0.000000e+00> : vector<8x256xf32>
    %161 = tpu.matmul %160, %4, %cst_43 {dimension_numbers = #tpu.dot_dimension_numbers<[1], [0], [0], [1], [0, 0, 1, 1], [], []>} : vector<8x64xf32>, vector<64x256xf32>, vector<8x256xf32> -> vector<8x256xf32>
    %162 = vector.broadcast %5 : vector<1x256xf32> to vector<8x256xf32>
    %163 = arith.addf %161, %162 : vector<8x256xf32>
    %164 = vector.extract_strided_slice %163 {offsets = [0, 0], sizes = [8, 128], strides = [1, 1]} : vector<8x256xf32> to vector<8x128xf32>
    %c32 = arith.constant 32 : index
    %c0_44 = arith.constant 0 : index
    %165 = vector.load %arg7[%c32, %c0_44] : memref<64x128xf32, #tpu.memory_space<vmem>>, vector<8x128xf32>
    %166 = arith.addf %164, %165 : vector<8x128xf32>
    %cst_45 = arith.constant 5.000000e-01 : f32
    %167 = vector.broadcast %cst_45 : f32 to vector<8x128xf32>
    %168 = arith.mulf %167, %166 : vector<8x128xf32>
    %169 = math.tanh %168 : vector<8x128xf32>
    %cst_46 = arith.constant 1.000000e+00 : f32
    %170 = vector.broadcast %cst_46 : f32 to vector<8x128xf32>
    %171 = arith.addf %169, %170 : vector<8x128xf32>
    %cst_47 = arith.constant 5.000000e-01 : f32
    %172 = vector.broadcast %cst_47 : f32 to vector<8x128xf32>
    %173 = arith.mulf %172, %171 : vector<8x128xf32>
    %174 = math.tanh %166 : vector<8x128xf32>
    %175 = vector.extract_strided_slice %173 {offsets = [0, 0], sizes = [8, 32], strides = [1, 1]} : vector<8x128xf32> to vector<8x32xf32>
    %176 = vector.extract_strided_slice %173 {offsets = [0, 32], sizes = [8, 32], strides = [1, 1]} : vector<8x128xf32> to vector<8x32xf32>
    %177 = vector.extract_strided_slice %174 {offsets = [0, 64], sizes = [8, 32], strides = [1, 1]} : vector<8x128xf32> to vector<8x32xf32>
    %178 = vector.extract_strided_slice %173 {offsets = [0, 96], sizes = [8, 32], strides = [1, 1]} : vector<8x128xf32> to vector<8x32xf32>
    %179 = arith.mulf %176, %139 : vector<8x32xf32>
    %180 = arith.mulf %175, %177 : vector<8x32xf32>
    %181 = arith.addf %179, %180 : vector<8x32xf32>
    %182 = math.tanh %181 : vector<8x32xf32>
    %183 = arith.mulf %178, %182 : vector<8x32xf32>
    %184 = vector.extract_strided_slice %163 {offsets = [0, 128], sizes = [8, 128], strides = [1, 1]} : vector<8x256xf32> to vector<8x128xf32>
    %cst_48 = arith.constant 5.000000e-01 : f32
    %185 = vector.broadcast %cst_48 : f32 to vector<8x128xf32>
    %186 = arith.mulf %185, %184 : vector<8x128xf32>
    %187 = math.tanh %186 : vector<8x128xf32>
    %cst_49 = arith.constant 1.000000e+00 : f32
    %188 = vector.broadcast %cst_49 : f32 to vector<8x128xf32>
    %189 = arith.addf %187, %188 : vector<8x128xf32>
    %cst_50 = arith.constant 5.000000e-01 : f32
    %190 = vector.broadcast %cst_50 : f32 to vector<8x128xf32>
    %191 = arith.mulf %190, %189 : vector<8x128xf32>
    %192 = math.tanh %184 : vector<8x128xf32>
    %193 = vector.extract_strided_slice %191 {offsets = [0, 0], sizes = [8, 32], strides = [1, 1]} : vector<8x128xf32> to vector<8x32xf32>
    %194 = vector.extract_strided_slice %191 {offsets = [0, 32], sizes = [8, 32], strides = [1, 1]} : vector<8x128xf32> to vector<8x32xf32>
    %195 = vector.extract_strided_slice %192 {offsets = [0, 64], sizes = [8, 32], strides = [1, 1]} : vector<8x128xf32> to vector<8x32xf32>
    %196 = vector.extract_strided_slice %191 {offsets = [0, 96], sizes = [8, 32], strides = [1, 1]} : vector<8x128xf32> to vector<8x32xf32>
    %197 = arith.mulf %194, %157 : vector<8x32xf32>
    %198 = arith.mulf %193, %195 : vector<8x32xf32>
    %199 = arith.addf %197, %198 : vector<8x32xf32>
    %200 = math.tanh %199 : vector<8x32xf32>
    %201 = arith.mulf %196, %200 : vector<8x32xf32>
    %202 = tpu.concatenate %183, %201 in 1 : vector<8x32xf32>, vector<8x32xf32> -> vector<8x64xf32>
    %cst_51 = arith.constant dense<0.000000e+00> : vector<8x256xf32>
    %203 = tpu.matmul %202, %4, %cst_51 {dimension_numbers = #tpu.dot_dimension_numbers<[1], [0], [0], [1], [0, 0, 1, 1], [], []>} : vector<8x64xf32>, vector<64x256xf32>, vector<8x256xf32> -> vector<8x256xf32>
    %204 = vector.broadcast %5 : vector<1x256xf32> to vector<8x256xf32>
    %205 = arith.addf %203, %204 : vector<8x256xf32>
    %206 = vector.extract_strided_slice %205 {offsets = [0, 0], sizes = [8, 128], strides = [1, 1]} : vector<8x256xf32> to vector<8x128xf32>
    %c40 = arith.constant 40 : index
    %c0_52 = arith.constant 0 : index
    %207 = vector.load %arg7[%c40, %c0_52] : memref<64x128xf32, #tpu.memory_space<vmem>>, vector<8x128xf32>
    %208 = arith.addf %206, %207 : vector<8x128xf32>
    %cst_53 = arith.constant 5.000000e-01 : f32
    %209 = vector.broadcast %cst_53 : f32 to vector<8x128xf32>
    %210 = arith.mulf %209, %208 : vector<8x128xf32>
    %211 = math.tanh %210 : vector<8x128xf32>
    %cst_54 = arith.constant 1.000000e+00 : f32
    %212 = vector.broadcast %cst_54 : f32 to vector<8x128xf32>
    %213 = arith.addf %211, %212 : vector<8x128xf32>
    %cst_55 = arith.constant 5.000000e-01 : f32
    %214 = vector.broadcast %cst_55 : f32 to vector<8x128xf32>
    %215 = arith.mulf %214, %213 : vector<8x128xf32>
    %216 = math.tanh %208 : vector<8x128xf32>
    %217 = vector.extract_strided_slice %215 {offsets = [0, 0], sizes = [8, 32], strides = [1, 1]} : vector<8x128xf32> to vector<8x32xf32>
    %218 = vector.extract_strided_slice %215 {offsets = [0, 32], sizes = [8, 32], strides = [1, 1]} : vector<8x128xf32> to vector<8x32xf32>
    %219 = vector.extract_strided_slice %216 {offsets = [0, 64], sizes = [8, 32], strides = [1, 1]} : vector<8x128xf32> to vector<8x32xf32>
    %220 = vector.extract_strided_slice %215 {offsets = [0, 96], sizes = [8, 32], strides = [1, 1]} : vector<8x128xf32> to vector<8x32xf32>
    %221 = arith.mulf %218, %181 : vector<8x32xf32>
    %222 = arith.mulf %217, %219 : vector<8x32xf32>
    %223 = arith.addf %221, %222 : vector<8x32xf32>
    %224 = math.tanh %223 : vector<8x32xf32>
    %225 = arith.mulf %220, %224 : vector<8x32xf32>
    %226 = vector.extract_strided_slice %205 {offsets = [0, 128], sizes = [8, 128], strides = [1, 1]} : vector<8x256xf32> to vector<8x128xf32>
    %cst_56 = arith.constant 5.000000e-01 : f32
    %227 = vector.broadcast %cst_56 : f32 to vector<8x128xf32>
    %228 = arith.mulf %227, %226 : vector<8x128xf32>
    %229 = math.tanh %228 : vector<8x128xf32>
    %cst_57 = arith.constant 1.000000e+00 : f32
    %230 = vector.broadcast %cst_57 : f32 to vector<8x128xf32>
    %231 = arith.addf %229, %230 : vector<8x128xf32>
    %cst_58 = arith.constant 5.000000e-01 : f32
    %232 = vector.broadcast %cst_58 : f32 to vector<8x128xf32>
    %233 = arith.mulf %232, %231 : vector<8x128xf32>
    %234 = math.tanh %226 : vector<8x128xf32>
    %235 = vector.extract_strided_slice %233 {offsets = [0, 0], sizes = [8, 32], strides = [1, 1]} : vector<8x128xf32> to vector<8x32xf32>
    %236 = vector.extract_strided_slice %233 {offsets = [0, 32], sizes = [8, 32], strides = [1, 1]} : vector<8x128xf32> to vector<8x32xf32>
    %237 = vector.extract_strided_slice %234 {offsets = [0, 64], sizes = [8, 32], strides = [1, 1]} : vector<8x128xf32> to vector<8x32xf32>
    %238 = vector.extract_strided_slice %233 {offsets = [0, 96], sizes = [8, 32], strides = [1, 1]} : vector<8x128xf32> to vector<8x32xf32>
    %239 = arith.mulf %236, %199 : vector<8x32xf32>
    %240 = arith.mulf %235, %237 : vector<8x32xf32>
    %241 = arith.addf %239, %240 : vector<8x32xf32>
    %242 = math.tanh %241 : vector<8x32xf32>
    %243 = arith.mulf %238, %242 : vector<8x32xf32>
    %244 = tpu.concatenate %225, %243 in 1 : vector<8x32xf32>, vector<8x32xf32> -> vector<8x64xf32>
    %cst_59 = arith.constant dense<0.000000e+00> : vector<8x256xf32>
    %245 = tpu.matmul %244, %4, %cst_59 {dimension_numbers = #tpu.dot_dimension_numbers<[1], [0], [0], [1], [0, 0, 1, 1], [], []>} : vector<8x64xf32>, vector<64x256xf32>, vector<8x256xf32> -> vector<8x256xf32>
    %246 = vector.broadcast %5 : vector<1x256xf32> to vector<8x256xf32>
    %247 = arith.addf %245, %246 : vector<8x256xf32>
    %248 = vector.extract_strided_slice %247 {offsets = [0, 0], sizes = [8, 128], strides = [1, 1]} : vector<8x256xf32> to vector<8x128xf32>
    %c48 = arith.constant 48 : index
    %c0_60 = arith.constant 0 : index
    %249 = vector.load %arg7[%c48, %c0_60] : memref<64x128xf32, #tpu.memory_space<vmem>>, vector<8x128xf32>
    %250 = arith.addf %248, %249 : vector<8x128xf32>
    %cst_61 = arith.constant 5.000000e-01 : f32
    %251 = vector.broadcast %cst_61 : f32 to vector<8x128xf32>
    %252 = arith.mulf %251, %250 : vector<8x128xf32>
    %253 = math.tanh %252 : vector<8x128xf32>
    %cst_62 = arith.constant 1.000000e+00 : f32
    %254 = vector.broadcast %cst_62 : f32 to vector<8x128xf32>
    %255 = arith.addf %253, %254 : vector<8x128xf32>
    %cst_63 = arith.constant 5.000000e-01 : f32
    %256 = vector.broadcast %cst_63 : f32 to vector<8x128xf32>
    %257 = arith.mulf %256, %255 : vector<8x128xf32>
    %258 = math.tanh %250 : vector<8x128xf32>
    %259 = vector.extract_strided_slice %257 {offsets = [0, 0], sizes = [8, 32], strides = [1, 1]} : vector<8x128xf32> to vector<8x32xf32>
    %260 = vector.extract_strided_slice %257 {offsets = [0, 32], sizes = [8, 32], strides = [1, 1]} : vector<8x128xf32> to vector<8x32xf32>
    %261 = vector.extract_strided_slice %258 {offsets = [0, 64], sizes = [8, 32], strides = [1, 1]} : vector<8x128xf32> to vector<8x32xf32>
    %262 = vector.extract_strided_slice %257 {offsets = [0, 96], sizes = [8, 32], strides = [1, 1]} : vector<8x128xf32> to vector<8x32xf32>
    %263 = arith.mulf %260, %223 : vector<8x32xf32>
    %264 = arith.mulf %259, %261 : vector<8x32xf32>
    %265 = arith.addf %263, %264 : vector<8x32xf32>
    %266 = math.tanh %265 : vector<8x32xf32>
    %267 = arith.mulf %262, %266 : vector<8x32xf32>
    %268 = vector.extract_strided_slice %247 {offsets = [0, 128], sizes = [8, 128], strides = [1, 1]} : vector<8x256xf32> to vector<8x128xf32>
    %cst_64 = arith.constant 5.000000e-01 : f32
    %269 = vector.broadcast %cst_64 : f32 to vector<8x128xf32>
    %270 = arith.mulf %269, %268 : vector<8x128xf32>
    %271 = math.tanh %270 : vector<8x128xf32>
    %cst_65 = arith.constant 1.000000e+00 : f32
    %272 = vector.broadcast %cst_65 : f32 to vector<8x128xf32>
    %273 = arith.addf %271, %272 : vector<8x128xf32>
    %cst_66 = arith.constant 5.000000e-01 : f32
    %274 = vector.broadcast %cst_66 : f32 to vector<8x128xf32>
    %275 = arith.mulf %274, %273 : vector<8x128xf32>
    %276 = math.tanh %268 : vector<8x128xf32>
    %277 = vector.extract_strided_slice %275 {offsets = [0, 0], sizes = [8, 32], strides = [1, 1]} : vector<8x128xf32> to vector<8x32xf32>
    %278 = vector.extract_strided_slice %275 {offsets = [0, 32], sizes = [8, 32], strides = [1, 1]} : vector<8x128xf32> to vector<8x32xf32>
    %279 = vector.extract_strided_slice %276 {offsets = [0, 64], sizes = [8, 32], strides = [1, 1]} : vector<8x128xf32> to vector<8x32xf32>
    %280 = vector.extract_strided_slice %275 {offsets = [0, 96], sizes = [8, 32], strides = [1, 1]} : vector<8x128xf32> to vector<8x32xf32>
    %281 = arith.mulf %278, %241 : vector<8x32xf32>
    %282 = arith.mulf %277, %279 : vector<8x32xf32>
    %283 = arith.addf %281, %282 : vector<8x32xf32>
    %284 = math.tanh %283 : vector<8x32xf32>
    %285 = arith.mulf %280, %284 : vector<8x32xf32>
    %286 = tpu.concatenate %267, %285 in 1 : vector<8x32xf32>, vector<8x32xf32> -> vector<8x64xf32>
    %cst_67 = arith.constant dense<0.000000e+00> : vector<8x256xf32>
    %287 = tpu.matmul %286, %4, %cst_67 {dimension_numbers = #tpu.dot_dimension_numbers<[1], [0], [0], [1], [0, 0, 1, 1], [], []>} : vector<8x64xf32>, vector<64x256xf32>, vector<8x256xf32> -> vector<8x256xf32>
    %288 = vector.broadcast %5 : vector<1x256xf32> to vector<8x256xf32>
    %289 = arith.addf %287, %288 : vector<8x256xf32>
    %290 = vector.extract_strided_slice %289 {offsets = [0, 0], sizes = [8, 128], strides = [1, 1]} : vector<8x256xf32> to vector<8x128xf32>
    %c56 = arith.constant 56 : index
    %c0_68 = arith.constant 0 : index
    %291 = vector.load %arg7[%c56, %c0_68] : memref<64x128xf32, #tpu.memory_space<vmem>>, vector<8x128xf32>
    %292 = arith.addf %290, %291 : vector<8x128xf32>
    %cst_69 = arith.constant 5.000000e-01 : f32
    %293 = vector.broadcast %cst_69 : f32 to vector<8x128xf32>
    %294 = arith.mulf %293, %292 : vector<8x128xf32>
    %295 = math.tanh %294 : vector<8x128xf32>
    %cst_70 = arith.constant 1.000000e+00 : f32
    %296 = vector.broadcast %cst_70 : f32 to vector<8x128xf32>
    %297 = arith.addf %295, %296 : vector<8x128xf32>
    %cst_71 = arith.constant 5.000000e-01 : f32
    %298 = vector.broadcast %cst_71 : f32 to vector<8x128xf32>
    %299 = arith.mulf %298, %297 : vector<8x128xf32>
    %300 = math.tanh %292 : vector<8x128xf32>
    %301 = vector.extract_strided_slice %299 {offsets = [0, 0], sizes = [8, 32], strides = [1, 1]} : vector<8x128xf32> to vector<8x32xf32>
    %302 = vector.extract_strided_slice %299 {offsets = [0, 32], sizes = [8, 32], strides = [1, 1]} : vector<8x128xf32> to vector<8x32xf32>
    %303 = vector.extract_strided_slice %300 {offsets = [0, 64], sizes = [8, 32], strides = [1, 1]} : vector<8x128xf32> to vector<8x32xf32>
    %304 = vector.extract_strided_slice %299 {offsets = [0, 96], sizes = [8, 32], strides = [1, 1]} : vector<8x128xf32> to vector<8x32xf32>
    %305 = arith.mulf %302, %265 : vector<8x32xf32>
    %306 = arith.mulf %301, %303 : vector<8x32xf32>
    %307 = arith.addf %305, %306 : vector<8x32xf32>
    %308 = math.tanh %307 : vector<8x32xf32>
    %309 = arith.mulf %304, %308 : vector<8x32xf32>
    %310 = vector.extract_strided_slice %289 {offsets = [0, 128], sizes = [8, 128], strides = [1, 1]} : vector<8x256xf32> to vector<8x128xf32>
    %cst_72 = arith.constant 5.000000e-01 : f32
    %311 = vector.broadcast %cst_72 : f32 to vector<8x128xf32>
    %312 = arith.mulf %311, %310 : vector<8x128xf32>
    %313 = math.tanh %312 : vector<8x128xf32>
    %cst_73 = arith.constant 1.000000e+00 : f32
    %314 = vector.broadcast %cst_73 : f32 to vector<8x128xf32>
    %315 = arith.addf %313, %314 : vector<8x128xf32>
    %cst_74 = arith.constant 5.000000e-01 : f32
    %316 = vector.broadcast %cst_74 : f32 to vector<8x128xf32>
    %317 = arith.mulf %316, %315 : vector<8x128xf32>
    %318 = math.tanh %310 : vector<8x128xf32>
    %319 = vector.extract_strided_slice %317 {offsets = [0, 0], sizes = [8, 32], strides = [1, 1]} : vector<8x128xf32> to vector<8x32xf32>
    %320 = vector.extract_strided_slice %317 {offsets = [0, 32], sizes = [8, 32], strides = [1, 1]} : vector<8x128xf32> to vector<8x32xf32>
    %321 = vector.extract_strided_slice %318 {offsets = [0, 64], sizes = [8, 32], strides = [1, 1]} : vector<8x128xf32> to vector<8x32xf32>
    %322 = vector.extract_strided_slice %317 {offsets = [0, 96], sizes = [8, 32], strides = [1, 1]} : vector<8x128xf32> to vector<8x32xf32>
    %323 = arith.mulf %320, %283 : vector<8x32xf32>
    %324 = arith.mulf %319, %321 : vector<8x32xf32>
    %325 = arith.addf %323, %324 : vector<8x32xf32>
    %326 = math.tanh %325 : vector<8x32xf32>
    %327 = arith.mulf %322, %326 : vector<8x32xf32>
    %328 = tpu.concatenate %309, %327 in 1 : vector<8x32xf32>, vector<8x32xf32> -> vector<8x64xf32>
    %cst_75 = arith.constant dense<0.000000e+00> : vector<8x256xf32>
    %329 = tpu.matmul %328, %4, %cst_75 {dimension_numbers = #tpu.dot_dimension_numbers<[1], [0], [0], [1], [0, 0, 1, 1], [], []>} : vector<8x64xf32>, vector<64x256xf32>, vector<8x256xf32> -> vector<8x256xf32>
    %330 = vector.broadcast %5 : vector<1x256xf32> to vector<8x256xf32>
    %331 = arith.addf %329, %330 : vector<8x256xf32>
    %332 = vector.extract_strided_slice %331 {offsets = [0, 128], sizes = [8, 128], strides = [1, 1]} : vector<8x256xf32> to vector<8x128xf32>
    %cst_76 = arith.constant 5.000000e-01 : f32
    %333 = vector.broadcast %cst_76 : f32 to vector<8x128xf32>
    %334 = arith.mulf %333, %332 : vector<8x128xf32>
    %335 = math.tanh %334 : vector<8x128xf32>
    %cst_77 = arith.constant 1.000000e+00 : f32
    %336 = vector.broadcast %cst_77 : f32 to vector<8x128xf32>
    %337 = arith.addf %335, %336 : vector<8x128xf32>
    %cst_78 = arith.constant 5.000000e-01 : f32
    %338 = vector.broadcast %cst_78 : f32 to vector<8x128xf32>
    %339 = arith.mulf %338, %337 : vector<8x128xf32>
    %340 = math.tanh %332 : vector<8x128xf32>
    %341 = vector.extract_strided_slice %339 {offsets = [0, 0], sizes = [8, 32], strides = [1, 1]} : vector<8x128xf32> to vector<8x32xf32>
    %342 = vector.extract_strided_slice %339 {offsets = [0, 32], sizes = [8, 32], strides = [1, 1]} : vector<8x128xf32> to vector<8x32xf32>
    %343 = vector.extract_strided_slice %340 {offsets = [0, 64], sizes = [8, 32], strides = [1, 1]} : vector<8x128xf32> to vector<8x32xf32>
    %344 = vector.extract_strided_slice %339 {offsets = [0, 96], sizes = [8, 32], strides = [1, 1]} : vector<8x128xf32> to vector<8x32xf32>
    %345 = arith.mulf %342, %325 : vector<8x32xf32>
    %346 = arith.mulf %341, %343 : vector<8x32xf32>
    %347 = arith.addf %345, %346 : vector<8x32xf32>
    %348 = math.tanh %347 : vector<8x32xf32>
    %349 = arith.mulf %344, %348 : vector<8x32xf32>
    %c0_79 = arith.constant 0 : index
    %c0_80 = arith.constant 0 : index
    %350 = vector.load %arg4[%c0_79, %c0_80] : memref<32x128xf32, #tpu.memory_space<vmem>>, vector<32x128xf32>
    %cst_81 = arith.constant dense<0.000000e+00> : vector<8x128xf32>
    %351 = tpu.matmul %349, %350, %cst_81 {dimension_numbers = #tpu.dot_dimension_numbers<[1], [0], [0], [1], [0, 0, 1, 1], [], []>} : vector<8x32xf32>, vector<32x128xf32>, vector<8x128xf32> -> vector<8x128xf32>
    %c0_82 = arith.constant 0 : index
    %c0_83 = arith.constant 0 : index
    %352 = vector.load %arg5[%c0_82, %c0_83] : memref<1x128xf32, #tpu.memory_space<vmem>>, vector<1x128xf32>
    %353 = vector.broadcast %352 : vector<1x128xf32> to vector<8x128xf32>
    %354 = arith.addf %351, %353 : vector<8x128xf32>
    %c0_84 = arith.constant 0 : index
    %c0_85 = arith.constant 0 : index
    %355 = vector.load %arg6[%c0_84, %c0_85] : memref<8x128xf32, #tpu.memory_space<vmem>>, vector<8x128xf32>
    tpu.vector_store %arg6[%c0_84, %c0_85], %354 {strides = array<i32>} : memref<8x128xf32, #tpu.memory_space<vmem>>, vector<8x128xf32>,
    return
  }
}

</mosaic_0001>

<llo_original>
// kernel: lstm_forward.1
$region0: #{lstm_forward.1}
  #allocation0 [shape = 'u32[]', space=smem, size = 0x4, offset = 0x4, fixed_abs, tag = 'smem constant byte address 0x4 - core index']
  #allocation1 [shape = 'u32[144,128]{1,0:T(1,128)}', space=vmem, size = 0x12000, scoped, tag = 'internal scratch']
  #allocation2 [shape = 'f32[64,128]{1,0:T(8,128)}', space=vmem, size = 0x8000, scoped, tag = 'scratch operand']
  %s0 = inlined_call_operand.hbm [shape: f32[64,4], index: 0, kind: input, shape index: {}]
  %s1 = inlined_call_operand.hbm [shape: f32[4,128], index: 1, kind: input, shape index: {}]
  %s2 = inlined_call_operand.hbm [shape: f32[64,256], index: 2, kind: input, shape index: {}]
  %s3 = inlined_call_operand.hbm [shape: f32[1,256], index: 3, kind: input, shape index: {}]
  %s4 = inlined_call_operand.hbm [shape: f32[32,128], index: 4, kind: input, shape index: {}]
  %s5 = inlined_call_operand.hbm [shape: f32[1,128], index: 5, kind: input, shape index: {}]
  %s6 = inlined_call_operand.hbm [shape: f32[8,128], index: 6, kind: output, shape index: {}]
  %s7 = sld [smem:[#allocation0]]
  $region58: #{lstm_forward.1} parent=0
    _
  %s9 = ssub.s32 1, %s7
  %s10 = scalar_select 0, %s9, %s7
  $region1: #{lstm_forward.1} parent=0
    #allocation3 [shape = 'u8[32768]{0}', space=vmem, size = 0x8000, scoped, tag = 'input window, operand 0, single buffered']
    #allocation4 [shape = 's32[1]{0}', space=sflag, size = 0x4, scoped, tag = 'scoped memory for lstm_forward.1']
    #allocation5 [shape = 's32[1]{0}', space=sflag, size = 0x4, scoped, tag = 'scoped memory for lstm_forward.1']
    #allocation6 [shape = 'u8[2048]{0}', space=vmem, size = 0x800, scoped, tag = 'input window, operand 1, single buffered']
    #allocation7 [shape = 's32[1]{0}', space=sflag, size = 0x4, scoped, tag = 'scoped memory for lstm_forward.1']
    #allocation8 [shape = 'u8[65536]{0}', space=vmem, size = 0x10000, scoped, tag = 'input window, operand 2, single buffered']
    #allocation9 [shape = 'u8[1024]{0}', space=vmem, size = 0x400, scoped, tag = 'input window, operand 3, single buffered']
    #allocation10 [shape = 's32[1]{0}', space=sflag, size = 0x4, scoped, tag = 'scoped memory for lstm_forward.1']
    #allocation11 [shape = 'u8[16384]{0}', space=vmem, size = 0x4000, scoped, tag = 'input window, operand 4, single buffered']
    #allocation12 [shape = 'u8[512]{0}', space=vmem, size = 0x400, scoped, tag = 'input window, operand 5, single buffered']
    #allocation13 [shape = 's32[1]{0}', space=sflag, size = 0x4, scoped, tag = 'scoped memory for lstm_forward.1']
    #allocation14 [shape = 'u8[4096]{0}', space=vmem, size = 0x1000, scoped, tag = 'output window, operand 0, single buffered']
    %11 = vsyncpa [#allocation4], 0
    %12 = vsyncpa [#allocation7], 0
    %13 = vsyncpa [#allocation10], 0
    %14 = vsyncpa [#allocation13], 0
    %15 = vsyncpa [#allocation5], 0
    // Predicated region
    $region2: #{lstm_forward.1} parent=1 // pred_check
      _
    $region3: #{lstm_forward.1} parent=1 // pred_check_branch
      %17 = sbr.rel (0) target = $region5
    $region4: #{lstm_forward.1} parent=1 // pred_region
      %s19 = ssub.s32 1024, 1024
      %20 = vsyncadd [#allocation4], %s19
      %s21 = sshll.u32 [#allocation3], 4
      %s22 = int_to_ptr.vmem [resolvable:$true] %s21
      %27 = dma.hbm_to_vmem [thread:$0]  %s0, 1024, %s22, [#allocation4], 128, 128, 8
    $region5: #{lstm_forward.1} parent=1 // pred_fallthru
      _
    // Predicated region
    $region6: #{lstm_forward.1} parent=1 // pred_check
      _
    $region7: #{lstm_forward.1} parent=1 // pred_check_branch
      %29 = sbr.rel (0) target = $region9
    $region8: #{lstm_forward.1} parent=1 // pred_region
      %s31 = ssub.s32 64, 64
      %32 = vsyncadd [#allocation7], %s31
      %s34 = sshll.u32 [#allocation6], 4
      %s35 = int_to_ptr.vmem [resolvable:$true] %s34
      %37 = dma.hbm_to_vmem [thread:$0]  %s1, 64, %s35, [#allocation7]
    $region9: #{lstm_forward.1} parent=1 // pred_fallthru
      _
    // Predicated region
    $region10: #{lstm_forward.1} parent=1 // pred_check
      _
    $region11: #{lstm_forward.1} parent=1 // pred_check_branch
      %39 = sbr.rel (0) target = $region13
    $region12: #{lstm_forward.1} parent=1 // pred_region
      %s41 = ssub.s32 2048, 2048
      %42 = vsyncadd [#allocation7], %s41
      %s43 = sshll.u32 [#allocation8], 4
      %s44 = int_to_ptr.vmem [resolvable:$true] %s43
      %49 = dma.hbm_to_vmem [thread:$0]  %s2, 2048, %s44, [#allocation7], 256, 256, 16
    $region13: #{lstm_forward.1} parent=1 // pred_fallthru
      _
    // Predicated region
    $region14: #{lstm_forward.1} parent=1 // pred_check
      _
    $region15: #{lstm_forward.1} parent=1 // pred_check_branch
      %51 = sbr.rel (0) target = $region17
    $region16: #{lstm_forward.1} parent=1 // pred_region
      %s53 = ssub.s32 32, 32
      %54 = vsyncadd [#allocation10], %s53
      %s56 = sshll.u32 [#allocation9], 4
      %s57 = int_to_ptr.vmem [resolvable:$true] %s56
      %59 = dma.hbm_to_vmem [thread:$0]  %s3, 32, %s57, [#allocation10]
    $region17: #{lstm_forward.1} parent=1 // pred_fallthru
      _
    // Predicated region
    $region18: #{lstm_forward.1} parent=1 // pred_check
      _
    $region19: #{lstm_forward.1} parent=1 // pred_check_branch
      %61 = sbr.rel (0) target = $region21
    $region20: #{lstm_forward.1} parent=1 // pred_region
      %s63 = ssub.s32 512, 512
      %64 = vsyncadd [#allocation10], %s63
      %s65 = sshll.u32 [#allocation11], 4
      %s66 = int_to_ptr.vmem [resolvable:$true] %s65
      %71 = dma.hbm_to_vmem [thread:$0]  %s4, 512, %s66, [#allocation10], 128, 128, 8
    $region21: #{lstm_forward.1} parent=1 // pred_fallthru
      _
    // Predicated region
    $region22: #{lstm_forward.1} parent=1 // pred_check
      _
    $region23: #{lstm_forward.1} parent=1 // pred_check_branch
      %73 = sbr.rel (0) target = $region25
    $region24: #{lstm_forward.1} parent=1 // pred_region
      %s75 = ssub.s32 16, 16
      %76 = vsyncadd [#allocation13], %s75
      %s78 = sshll.u32 [#allocation12], 4
      %s79 = int_to_ptr.vmem [resolvable:$true] %s78
      %81 = dma.hbm_to_vmem [thread:$0]  %s5, 16, %s79, [#allocation13]
    $region25: #{lstm_forward.1} parent=1 // pred_fallthru
      _
    // Predicated region
    $region26: #{lstm_forward.1} parent=1 // pred_check
      _
    $region27: #{lstm_forward.1} parent=1 // pred_check_branch
      %83 = sbr.rel (0) target = $region29
    $region28: #{lstm_forward.1} parent=1 // pred_region
      %84 = dma.done [#allocation4], 1024
    $region29: #{lstm_forward.1} parent=1 // pred_fallthru
      _
    // Predicated region
    $region30: #{lstm_forward.1} parent=1 // pred_check
      _
    $region31: #{lstm_forward.1} parent=1 // pred_check_branch
      %86 = sbr.rel (0) target = $region33
    $region32: #{lstm_forward.1} parent=1 // pred_region
      %87 = dma.done [#allocation7], 64
    $region33: #{lstm_forward.1} parent=1 // pred_fallthru
      _
    // Predicated region
    $region34: #{lstm_forward.1} parent=1 // pred_check
      _
    $region35: #{lstm_forward.1} parent=1 // pred_check_branch
      %89 = sbr.rel (0) target = $region37
    $region36: #{lstm_forward.1} parent=1 // pred_region
      %90 = dma.done [#allocation7], 2048
    $region37: #{lstm_forward.1} parent=1 // pred_fallthru
      _
    // Predicated region
    $region38: #{lstm_forward.1} parent=1 // pred_check
      _
    $region39: #{lstm_forward.1} parent=1 // pred_check_branch
      %92 = sbr.rel (0) target = $region41
    $region40: #{lstm_forward.1} parent=1 // pred_region
      %93 = dma.done [#allocation10], 32
    $region41: #{lstm_forward.1} parent=1 // pred_fallthru
      _
    // Predicated region
    $region42: #{lstm_forward.1} parent=1 // pred_check
      _
    $region43: #{lstm_forward.1} parent=1 // pred_check_branch
      %95 = sbr.rel (0) target = $region45
    $region44: #{lstm_forward.1} parent=1 // pred_region
      %96 = dma.done [#allocation10], 512
    $region45: #{lstm_forward.1} parent=1 // pred_fallthru
      _
    // Predicated region
    $region46: #{lstm_forward.1} parent=1 // pred_check
      _
    $region47: #{lstm_forward.1} parent=1 // pred_check_branch
      %98 = sbr.rel (0) target = $region49
    $region48: #{lstm_forward.1} parent=1 // pred_region
      %99 = dma.done [#allocation13], 16
    $region49: #{lstm_forward.1} parent=1 // pred_fallthru
      _
    %v100 = vld [vmem:[#allocation3] sm:$0xff]
    %v101 = vld [vmem:[#allocation3 + $0x8] sm:$0xff]
    %v102 = vld [vmem:[#allocation3 + $0x10] sm:$0xff]
    %v103 = vld [vmem:[#allocation3 + $0x18] sm:$0xff]
    %v104 = vld [vmem:[#allocation3 + $0x20] sm:$0xff]
    %v105 = vld [vmem:[#allocation3 + $0x28] sm:$0xff]
    %v106 = vld [vmem:[#allocation3 + $0x30] sm:$0xff]
    %v107 = vld [vmem:[#allocation3 + $0x38] sm:$0xff]
    %v108 = vld [vmem:[#allocation6] sm:$0xf]
    %vm109 = vcmask 31744
    %v111 = vsel %vm109, %v100, 0
    %v114 = vsel %vm109, %v101, 0
    %v117 = vsel %vm109, %v102, 0
    %v120 = vsel %vm109, %v103, 0
    %v123 = vsel %vm109, %v104, 0
    %v126 = vsel %vm109, %v105, 0
    %v129 = vsel %vm109, %v106, 0
    %v132 = vsel %vm109, %v107, 0
    %vm134 = vcmask 1043456
    %v136 = vsel %vm134, %v108, 0
    %138 = vmatprep.subr.mxu0 0.0
    %139 = vmatpush1.msra.mxu0 %v136
    %140 = vmatprep.subr.mxu0 0.0
    %141 = vmatpush1.msra.mxu0 0.0
    %142 = vmatprep.subr.mxu0 0.0
    %143 = vmatpush1.msra.mxu0 0.0
    %144 = vmatprep.subr.mxu0 0.0
    %145 = vmatpush1.msra.mxu0 0.0
    %146 = vmatprep.subr.mxu0 0.0
    %147 = vmatpush1.msra.mxu0 0.0
    %148 = vmatprep.subr.mxu0 0.0
    %149 = vmatpush1.msra.mxu0 0.0
    %150 = vmatprep.subr.mxu0 0.0
    %151 = vmatpush1.msra.mxu0 0.0
    %152 = vmatprep.subr.mxu0 0.0
    %153 = vmatpush1.msra.mxu0 0.0
    %154 = vmatprep.subr.mxu0 0.0
    %155 = vmatpush1.msra.mxu0 0.0
    %156 = vmatprep.subr.mxu0 0.0
    %157 = vmatpush1.msra.mxu0 0.0
    %158 = vmatprep.subr.mxu0 0.0
    %159 = vmatpush1.msra.mxu0 0.0
    %160 = vmatprep.subr.mxu0 0.0
    %161 = vmatpush1.msra.mxu0 0.0
    %162 = vmatprep.subr.mxu0 0.0
    %163 = vmatpush1.msra.mxu0 0.0
    %164 = vmatprep.subr.mxu0 0.0
    %165 = vmatpush1.msra.mxu0 0.0
    %166 = vmatprep.subr.mxu0 0.0
    %167 = vmatpush1.msra.mxu0 0.0
    %168 = vmatprep.subr.mxu0 0.0
    %169 = vmatpush1.msra.mxu0 0.0
    %170 = vmatprep.subr.mxu0 0.0
    %171 = vmatpush1.msra.mxu0 0.0
    %172 = vmatprep.subr.mxu0 0.0
    %173 = vmatpush1.msra.mxu0 0.0
    %174 = vmatprep.subr.mxu0 0.0
    %175 = vmatpush1.msra.mxu0 0.0
    %176 = vmatprep.subr.mxu0 0.0
    %177 = vmatpush1.msra.mxu0 0.0
    %178 = vmatprep.subr.mxu0 0.0
    %179 = vmatpush1.msra.mxu0 0.0
    %180 = vmatprep.subr.mxu0 0.0
    %181 = vmatpush1.msra.mxu0 0.0
    %182 = vmatprep.subr.mxu0 0.0
    %183 = vmatpush1.msra.mxu0 0.0
    %184 = vmatprep.subr.mxu0 0.0
    %185 = vmatpush1.msra.mxu0 0.0
    %186 = vmatprep.subr.mxu0 0.0
    %187 = vmatpush1.msra.mxu0 0.0
    %188 = vmatprep.subr.mxu0 0.0
    %189 = vmatpush1.msra.mxu0 0.0
    %190 = vmatprep.subr.mxu0 0.0
    %191 = vmatpush1.msra.mxu0 0.0
    %192 = vmatprep.subr.mxu0 0.0
    %193 = vmatpush1.msra.mxu0 0.0
    %194 = vmatprep.subr.mxu0 0.0
    %195 = vmatpush1.msra.mxu0 0.0
    %196 = vmatprep.subr.mxu0 0.0
    %197 = vmatpush1.msra.mxu0 0.0
    %198 = vmatprep.subr.mxu0 0.0
    %199 = vmatpush1.msra.mxu0 0.0
    %200 = vmatprep.subr.mxu0 0.0
    %201 = vmatpush1.msra.mxu0 0.0
    %202 = vmatprep.mubr.f32.mxu0 0.0
    %203 = vmatmul.mubr.f32.gmra.mrb[0].mxu0 %v111
    %v204 = vpop.f32.mrb[0].mxu0
    %v205 = vadd.f32 0.0, %v204
    %v206 = vpop.f32.mrb[0].mxu0
    %207 = vmatprep.mubr.f32.mxu0 0.0
    %208 = vmatmul.mubr.f32.gmra.mrb[0].mxu0 %v114
    %v209 = vpop.f32.mrb[0].mxu0
    %v210 = vadd.f32 0.0, %v209
    %v211 = vpop.f32.mrb[0].mxu0
    %212 = vmatprep.mubr.f32.mxu0 0.0
    %213 = vmatmul.mubr.f32.gmra.mrb[0].mxu0 %v117
    %v214 = vpop.f32.mrb[0].mxu0
    %v215 = vadd.f32 0.0, %v214
    %v216 = vpop.f32.mrb[0].mxu0
    %217 = vmatprep.mubr.f32.mxu0 0.0
    %218 = vmatmul.mubr.f32.gmra.mrb[0].mxu0 %v120
    %v219 = vpop.f32.mrb[0].mxu0
    %v220 = vadd.f32 0.0, %v219
    %v221 = vpop.f32.mrb[0].mxu0
    %222 = vmatprep.mubr.f32.mxu0 0.0
    %223 = vmatmul.mubr.f32.gmra.mrb[0].mxu0 %v123
    %v224 = vpop.f32.mrb[0].mxu0
    %v225 = vadd.f32 0.0, %v224
    %v226 = vpop.f32.mrb[0].mxu0
    %227 = vmatprep.mubr.f32.mxu0 0.0
    %228 = vmatmul.mubr.f32.gmra.mrb[0].mxu0 %v126
    %v229 = vpop.f32.mrb[0].mxu0
    %v230 = vadd.f32 0.0, %v229
    %v231 = vpop.f32.mrb[0].mxu0
    %232 = vmatprep.mubr.f32.mxu0 0.0
    %233 = vmatmul.mubr.f32.gmra.mrb[0].mxu0 %v129
    %v234 = vpop.f32.mrb[0].mxu0
    %v235 = vadd.f32 0.0, %v234
    %v236 = vpop.f32.mrb[0].mxu0
    %237 = vmatprep.mubr.f32.mxu0 0.0
    %238 = vmatmul.mubr.f32.gmra.mrb[0].mxu0 %v132
    %v239 = vpop.f32.mrb[0].mxu0
    %v240 = vadd.f32 0.0, %v239
    %v241 = vpop.f32.mrb[0].mxu0
    %242 = vdwg.mxu0
    %243 = vst [vmem:[#allocation2] sm:$0xff] %v205
    %244 = vst [vmem:[#allocation2 + $0x8] sm:$0xff] %v210
    %245 = vst [vmem:[#allocation2 + $0x10] sm:$0xff] %v215
    %246 = vst [vmem:[#allocation2 + $0x18] sm:$0xff] %v220
    %247 = vst [vmem:[#allocation2 + $0x20] sm:$0xff] %v225
    %248 = vst [vmem:[#allocation2 + $0x28] sm:$0xff] %v230
    %249 = vst [vmem:[#allocation2 + $0x30] sm:$0xff] %v235
    %250 = vst [vmem:[#allocation2 + $0x38] sm:$0xff] %v240
    %v251 = vld [vmem:[#allocation8] sm:$0xff]
    %v252 = vld [vmem:[#allocation8 + $0x8] sm:$0xff]
    %v253 = vld [vmem:[#allocation8 + $0x10] sm:$0xff]
    %v254 = vld [vmem:[#allocation8 + $0x18] sm:$0xff]
    %v255 = vld [vmem:[#allocation8 + $0x20] sm:$0xff]
    %v256 = vld [vmem:[#allocation8 + $0x28] sm:$0xff]
    %v257 = vld [vmem:[#allocation8 + $0x30] sm:$0xff]
    %v258 = vld [vmem:[#allocation8 + $0x38] sm:$0xff]
    %v259 = vld [vmem:[#allocation8 + $0x40] sm:$0xff]
    %v260 = vld [vmem:[#allocation8 + $0x48] sm:$0xff]
    %v261 = vld [vmem:[#allocation8 + $0x50] sm:$0xff]
    %v262 = vld [vmem:[#allocation8 + $0x58] sm:$0xff]
    %v263 = vld [vmem:[#allocation8 + $0x60] sm:$0xff]
    %v264 = vld [vmem:[#allocation8 + $0x68] sm:$0xff]
    %v265 = vld [vmem:[#allocation8 + $0x70] sm:$0xff]
    %v266 = vld [vmem:[#allocation8 + $0x78] sm:$0xff]
    %v267 = vld [vmem:[#allocation9] sm:$0x3]
    %v269 = vlaneseq
    %v270 = vshrl.u32 %v269, 7
    %v271 = vsub.s32 0, %v270
    %v272 = vrot.slane %v267, %v271
    %v273 = vlaneseq
    %v274 = vshrl.u32 %v273, 7
    %v275 = vsub.s32 1, %v274
    %v276 = vrot.slane %v267, %v275
    %vm279 = vcmask 523264
    %v281 = vsel %vm279, 0.0, 0
    %283 = vmatprep.subr.mxu0 %v252
    %284 = vmatpush1.msra.mxu0 %v251
    %285 = vmatprep.subr.mxu0 %v254
    %286 = vmatpush1.msra.mxu0 %v253
    %287 = vmatprep.subr.mxu0 %v256
    %288 = vmatpush1.msra.mxu0 %v255
    %289 = vmatprep.subr.mxu0 %v258
    %290 = vmatpush1.msra.mxu0 %v257
    %291 = vmatprep.subr.mxu0 %v260
    %292 = vmatpush1.msra.mxu0 %v259
    %293 = vmatprep.subr.mxu0 %v262
    %294 = vmatpush1.msra.mxu0 %v261
    %295 = vmatprep.subr.mxu0 %v264
    %296 = vmatpush1.msra.mxu0 %v263
    %297 = vmatprep.subr.mxu0 %v266
    %298 = vmatpush1.msra.mxu0 %v265
    %299 = vmatprep.subr.mxu0 0.0
    %300 = vmatpush1.msra.mxu0 0.0
    %301 = vmatprep.subr.mxu0 0.0
    %302 = vmatpush1.msra.mxu0 0.0
    %303 = vmatprep.subr.mxu0 0.0
    %304 = vmatpush1.msra.mxu0 0.0
    %305 = vmatprep.subr.mxu0 0.0
    %306 = vmatpush1.msra.mxu0 0.0
    %307 = vmatprep.subr.mxu0 0.0
    %308 = vmatpush1.msra.mxu0 0.0
    %309 = vmatprep.subr.mxu0 0.0
    %310 = vmatpush1.msra.mxu0 0.0
    %311 = vmatprep.subr.mxu0 0.0
    %312 = vmatpush1.msra.mxu0 0.0
    %313 = vmatprep.subr.mxu0 0.0
    %314 = vmatpush1.msra.mxu0 0.0
    %315 = vmatprep.subr.mxu0 0.0
    %316 = vmatpush1.msra.mxu0 0.0
    %317 = vmatprep.subr.mxu0 0.0
    %318 = vmatpush1.msra.mxu0 0.0
    %319 = vmatprep.subr.mxu0 0.0
    %320 = vmatpush1.msra.mxu0 0.0
    %321 = vmatprep.subr.mxu0 0.0
    %322 = vmatpush1.msra.mxu0 0.0
    %323 = vmatprep.subr.mxu0 0.0
    %324 = vmatpush1.msra.mxu0 0.0
    %325 = vmatprep.subr.mxu0 0.0
    %326 = vmatpush1.msra.mxu0 0.0
    %327 = vmatprep.subr.mxu0 0.0
    %328 = vmatpush1.msra.mxu0 0.0
    %329 = vmatprep.subr.mxu0 0.0
    %330 = vmatpush1.msra.mxu0 0.0
    %331 = vmatprep.subr.mxu0 0.0
    %332 = vmatpush1.msra.mxu0 0.0
    %333 = vmatprep.subr.mxu0 0.0
    %334 = vmatpush1.msra.mxu0 0.0
    %335 = vmatprep.subr.mxu0 0.0
    %336 = vmatpush1.msra.mxu0 0.0
    %337 = vmatprep.subr.mxu0 0.0
    %338 = vmatpush1.msra.mxu0 0.0
    %339 = vmatprep.subr.mxu0 0.0
    %340 = vmatpush1.msra.mxu0 0.0
    %341 = vmatprep.subr.mxu0 0.0
    %342 = vmatpush1.msra.mxu0 0.0
    %343 = vmatprep.subr.mxu0 0.0
    %344 = vmatpush1.msra.mxu0 0.0
    %345 = vmatprep.subr.mxu0 0.0
    %346 = vmatpush1.msra.mxu0 0.0
    %347 = vmatprep.mubr.f32.mxu0 0.0
    %348 = vmatmul.mubr.f32.gmra.mrb[0].mxu0 %v281
    %v349 = vpop.f32.mrb[0].mxu0
    %v350 = vadd.f32 %v272, %v349
    %v351 = vpop.f32.mrb[0].mxu0
    %352 = vdwg.mxu0
    %v353 = vld [vmem:[#allocation2] sm:$0xff]
    %v354 = vadd.f32 %v350, %v353
    %v355 = vmul.f32 %v354, 0.5
    %v356 = vtanh.pop %v355
    %v357 = vadd.f32 %v356, 1.0
    %v358 = vmul.f32 %v357, 0.5
    %v359 = vtanh.pop %v354
    %v360 = vmul.f32 %v358, 0.0
    %362 = vrot.lane.b32.xlu0 %v359, 64
    %v363 = vpop.permute.xlu0 %362
    %v365 = vmul.f32 %v358, %v363
    %367 = vrot.lane.b32.xlu0 %v365, 32
    %v368 = vpop.permute.xlu0 %367
    %v370 = vadd.f32 %v360, %v368
    %v371 = vtanh.pop %v370
    %373 = vrot.lane.b32.xlu0 %v371, 64
    %v374 = vpop.permute.xlu0 %373
    %v376 = vmul.f32 %v358, %v374
    %378 = vrot.lane.b32.xlu0 %v376, 32
    %v379 = vpop.permute.xlu0 %378
    %vm381 = vcmask 261120
    %v382 = vsel %vm381, %v379, 0.0
    %v384 = vsel %vm279, %v382, 0
    %386 = vmatprep.subr.mxu0 %v252
    %387 = vmatpush1.msra.mxu0 %v251
    %388 = vmatprep.subr.mxu0 %v254
    %389 = vmatpush1.msra.mxu0 %v253
    %390 = vmatprep.subr.mxu0 %v256
    %391 = vmatpush1.msra.mxu0 %v255
    %392 = vmatprep.subr.mxu0 %v258
    %393 = vmatpush1.msra.mxu0 %v257
    %394 = vmatprep.subr.mxu0 %v260
    %395 = vmatpush1.msra.mxu0 %v259
    %396 = vmatprep.subr.mxu0 %v262
    %397 = vmatpush1.msra.mxu0 %v261
    %398 = vmatprep.subr.mxu0 %v264
    %399 = vmatpush1.msra.mxu0 %v263
    %400 = vmatprep.subr.mxu0 %v266
    %401 = vmatpush1.msra.mxu0 %v265
    %402 = vmatprep.subr.mxu0 0.0
    %403 = vmatpush1.msra.mxu0 0.0
    %404 = vmatprep.subr.mxu0 0.0
    %405 = vmatpush1.msra.mxu0 0.0
    %406 = vmatprep.subr.mxu0 0.0
    %407 = vmatpush1.msra.mxu0 0.0
    %408 = vmatprep.subr.mxu0 0.0
    %409 = vmatpush1.msra.mxu0 0.0
    %410 = vmatprep.subr.mxu0 0.0
    %411 = vmatpush1.msra.mxu0 0.0
    %412 = vmatprep.subr.mxu0 0.0
    %413 = vmatpush1.msra.mxu0 0.0
    %414 = vmatprep.subr.mxu0 0.0
    %415 = vmatpush1.msra.mxu0 0.0
    %416 = vmatprep.subr.mxu0 0.0
    %417 = vmatpush1.msra.mxu0 0.0
    %418 = vmatprep.subr.mxu0 0.0
    %419 = vmatpush1.msra.mxu0 0.0
    %420 = vmatprep.subr.mxu0 0.0
    %421 = vmatpush1.msra.mxu0 0.0
    %422 = vmatprep.subr.mxu0 0.0
    %423 = vmatpush1.msra.mxu0 0.0
    %424 = vmatprep.subr.mxu0 0.0
    %425 = vmatpush1.msra.mxu0 0.0
    %426 = vmatprep.subr.mxu0 0.0
    %427 = vmatpush1.msra.mxu0 0.0
    %428 = vmatprep.subr.mxu0 0.0
    %429 = vmatpush1.msra.mxu0 0.0
    %430 = vmatprep.subr.mxu0 0.0
    %431 = vmatpush1.msra.mxu0 0.0
    %432 = vmatprep.subr.mxu0 0.0
    %433 = vmatpush1.msra.mxu0 0.0
    %434 = vmatprep.subr.mxu0 0.0
    %435 = vmatpush1.msra.mxu0 0.0
    %436 = vmatprep.subr.mxu0 0.0
    %437 = vmatpush1.msra.mxu0 0.0
    %438 = vmatprep.subr.mxu0 0.0
    %439 = vmatpush1.msra.mxu0 0.0
    %440 = vmatprep.subr.mxu0 0.0
    %441 = vmatpush1.msra.mxu0 0.0
    %442 = vmatprep.subr.mxu0 0.0
    %443 = vmatpush1.msra.mxu0 0.0
    %444 = vmatprep.subr.mxu0 0.0
    %445 = vmatpush1.msra.mxu0 0.0
    %446 = vmatprep.subr.mxu0 0.0
    %447 = vmatpush1.msra.mxu0 0.0
    %448 = vmatprep.subr.mxu0 0.0
    %449 = vmatpush1.msra.mxu0 0.0
    %450 = vmatprep.mubr.f32.mxu0 0.0
    %451 = vmatmul.mubr.f32.gmra.mrb[0].mxu0 %v384
    %v452 = vpop.f32.mrb[0].mxu0
    %v453 = vadd.f32 %v272, %v452
    %v454 = vpop.f32.mrb[0].mxu0
    %v455 = vadd.f32 %v276, %v454
    %456 = vdwg.mxu0
    %v457 = vld [vmem:[#allocation2 + $0x8] sm:$0xff]
    %v458 = vadd.f32 %v453, %v457
    %v459 = vmul.f32 %v458, 0.5
    %v460 = vtanh.pop %v459
    %v461 = vadd.f32 %v460, 1.0
    %v462 = vmul.f32 %v461, 0.5
    %v463 = vtanh.pop %v458
    %v464 = vmul.f32 %v462, %v370
    %466 = vrot.lane.b32.xlu0 %v463, 64
    %v467 = vpop.permute.xlu0 %466
    %v469 = vmul.f32 %v462, %v467
    %471 = vrot.lane.b32.xlu0 %v469, 32
    %v472 = vpop.permute.xlu0 %471
    %v474 = vadd.f32 %v464, %v472
    %v475 = vtanh.pop %v474
    %477 = vrot.lane.b32.xlu0 %v475, 64
    %v478 = vpop.permute.xlu0 %477
    %v480 = vmul.f32 %v462, %v478
    %v481 = vmul.f32 %v455, 0.5
    %v482 = vtanh.pop %v481
    %v483 = vadd.f32 %v482, 1.0
    %v484 = vmul.f32 %v483, 0.5
    %v485 = vtanh.pop %v455
    %v486 = vmul.f32 %v484, 0.0
    %488 = vrot.lane.b32.xlu0 %v485, 64
    %v489 = vpop.permute.xlu0 %488
    %v491 = vmul.f32 %v484, %v489
    %493 = vrot.lane.b32.xlu0 %v491, 32
    %v494 = vpop.permute.xlu0 %493
    %v496 = vadd.f32 %v486, %v494
    %v497 = vtanh.pop %v496
    %499 = vrot.lane.b32.xlu0 %v497, 64
    %v500 = vpop.permute.xlu0 %499
    %v502 = vmul.f32 %v484, %v500
    %504 = vrot.lane.b32.xlu0 %v480, 32
    %v505 = vpop.permute.xlu0 %504
    %508 = vrot.lane.b32.xlu0 %v502, 64
    %v509 = vpop.permute.xlu0 %508
    %v511 = vsel %vm381, %v505, %v509
    %v513 = vsel %vm279, %v511, 0
    %515 = vmatprep.subr.mxu0 %v252
    %516 = vmatpush1.msra.mxu0 %v251
    %517 = vmatprep.subr.mxu0 %v254
    %518 = vmatpush1.msra.mxu0 %v253
    %519 = vmatprep.subr.mxu0 %v256
    %520 = vmatpush1.msra.mxu0 %v255
    %521 = vmatprep.subr.mxu0 %v258
    %522 = vmatpush1.msra.mxu0 %v257
    %523 = vmatprep.subr.mxu0 %v260
    %524 = vmatpush1.msra.mxu0 %v259
    %525 = vmatprep.subr.mxu0 %v262
    %526 = vmatpush1.msra.mxu0 %v261
    %527 = vmatprep.subr.mxu0 %v264
    %528 = vmatpush1.msra.mxu0 %v263
    %529 = vmatprep.subr.mxu0 %v266
    %530 = vmatpush1.msra.mxu0 %v265
    %531 = vmatprep.subr.mxu0 0.0
    %532 = vmatpush1.msra.mxu0 0.0
    %533 = vmatprep.subr.mxu0 0.0
    %534 = vmatpush1.msra.mxu0 0.0
    %535 = vmatprep.subr.mxu0 0.0
    %536 = vmatpush1.msra.mxu0 0.0
    %537 = vmatprep.subr.mxu0 0.0
    %538 = vmatpush1.msra.mxu0 0.0
    %539 = vmatprep.subr.mxu0 0.0
    %540 = vmatpush1.msra.mxu0 0.0
    %541 = vmatprep.subr.mxu0 0.0
    %542 = vmatpush1.msra.mxu0 0.0
    %543 = vmatprep.subr.mxu0 0.0
    %544 = vmatpush1.msra.mxu0 0.0
    %545 = vmatprep.subr.mxu0 0.0
    %546 = vmatpush1.msra.mxu0 0.0
    %547 = vmatprep.subr.mxu0 0.0
    %548 = vmatpush1.msra.mxu0 0.0
    %549 = vmatprep.subr.mxu0 0.0
    %550 = vmatpush1.msra.mxu0 0.0
    %551 = vmatprep.subr.mxu0 0.0
    %552 = vmatpush1.msra.mxu0 0.0
    %553 = vmatprep.subr.mxu0 0.0
    %554 = vmatpush1.msra.mxu0 0.0
    %555 = vmatprep.subr.mxu0 0.0
    %556 = vmatpush1.msra.mxu0 0.0
    %557 = vmatprep.subr.mxu0 0.0
    %558 = vmatpush1.msra.mxu0 0.0
    %559 = vmatprep.subr.mxu0 0.0
    %560 = vmatpush1.msra.mxu0 0.0
    %561 = vmatprep.subr.mxu0 0.0
    %562 = vmatpush1.msra.mxu0 0.0
    %563 = vmatprep.subr.mxu0 0.0
    %564 = vmatpush1.msra.mxu0 0.0
    %565 = vmatprep.subr.mxu0 0.0
    %566 = vmatpush1.msra.mxu0 0.0
    %567 = vmatprep.subr.mxu0 0.0
    %568 = vmatpush1.msra.mxu0 0.0
    %569 = vmatprep.subr.mxu0 0.0
    %570 = vmatpush1.msra.mxu0 0.0
    %571 = vmatprep.subr.mxu0 0.0
    %572 = vmatpush1.msra.mxu0 0.0
    %573 = vmatprep.subr.mxu0 0.0
    %574 = vmatpush1.msra.mxu0 0.0
    %575 = vmatprep.subr.mxu0 0.0
    %576 = vmatpush1.msra.mxu0 0.0
    %577 = vmatprep.subr.mxu0 0.0
    %578 = vmatpush1.msra.mxu0 0.0
    %579 = vmatprep.mubr.f32.mxu0 0.0
    %580 = vmatmul.mubr.f32.gmra.mrb[0].mxu0 %v513
    %v581 = vpop.f32.mrb[0].mxu0
    %v582 = vadd.f32 %v272, %v581
    %v583 = vpop.f32.mrb[0].mxu0
    %v584 = vadd.f32 %v276, %v583
    %585 = vdwg.mxu0
    %v586 = vld [vmem:[#allocation2 + $0x10] sm:$0xff]
    %v587 = vadd.f32 %v582, %v586
    %v588 = vmul.f32 %v587, 0.5
    %v589 = vtanh.pop %v588
    %v590 = vadd.f32 %v589, 1.0
    %v591 = vmul.f32 %v590, 0.5
    %v592 = vtanh.pop %v587
    %v593 = vmul.f32 %v591, %v474
    %595 = vrot.lane.b32.xlu0 %v592, 64
    %v596 = vpop.permute.xlu0 %595
    %v598 = vmul.f32 %v591, %v596
    %600 = vrot.lane.b32.xlu0 %v598, 32
    %v601 = vpop.permute.xlu0 %600
    %v603 = vadd.f32 %v593, %v601
    %v604 = vtanh.pop %v603
    %606 = vrot.lane.b32.xlu0 %v604, 64
    %v607 = vpop.permute.xlu0 %606
    %v609 = vmul.f32 %v591, %v607
    %v610 = vmul.f32 %v584, 0.5
    %v611 = vtanh.pop %v610
    %v612 = vadd.f32 %v611, 1.0
    %v613 = vmul.f32 %v612, 0.5
    %v614 = vtanh.pop %v584
    %v615 = vmul.f32 %v613, %v496
    %617 = vrot.lane.b32.xlu0 %v614, 64
    %v618 = vpop.permute.xlu0 %617
    %v620 = vmul.f32 %v613, %v618
    %622 = vrot.lane.b32.xlu0 %v620, 32
    %v623 = vpop.permute.xlu0 %622
    %v625 = vadd.f32 %v615, %v623
    %v626 = vtanh.pop %v625
    %628 = vrot.lane.b32.xlu0 %v626, 64
    %v629 = vpop.permute.xlu0 %628
    %v631 = vmul.f32 %v613, %v629
    %633 = vrot.lane.b32.xlu0 %v609, 32
    %v634 = vpop.permute.xlu0 %633
    %637 = vrot.lane.b32.xlu0 %v631, 64
    %v638 = vpop.permute.xlu0 %637
    %v640 = vsel %vm381, %v634, %v638
    %v642 = vsel %vm279, %v640, 0
    %644 = vmatprep.subr.mxu0 %v252
    %645 = vmatpush1.msra.mxu0 %v251
    %646 = vmatprep.subr.mxu0 %v254
    %647 = vmatpush1.msra.mxu0 %v253
    %648 = vmatprep.subr.mxu0 %v256
    %649 = vmatpush1.msra.mxu0 %v255
    %650 = vmatprep.subr.mxu0 %v258
    %651 = vmatpush1.msra.mxu0 %v257
    %652 = vmatprep.subr.mxu0 %v260
    %653 = vmatpush1.msra.mxu0 %v259
    %654 = vmatprep.subr.mxu0 %v262
    %655 = vmatpush1.msra.mxu0 %v261
    %656 = vmatprep.subr.mxu0 %v264
    %657 = vmatpush1.msra.mxu0 %v263
    %658 = vmatprep.subr.mxu0 %v266
    %659 = vmatpush1.msra.mxu0 %v265
    %660 = vmatprep.subr.mxu0 0.0
    %661 = vmatpush1.msra.mxu0 0.0
    %662 = vmatprep.subr.mxu0 0.0
    %663 = vmatpush1.msra.mxu0 0.0
    %664 = vmatprep.subr.mxu0 0.0
    %665 = vmatpush1.msra.mxu0 0.0
    %666 = vmatprep.subr.mxu0 0.0
    %667 = vmatpush1.msra.mxu0 0.0
    %668 = vmatprep.subr.mxu0 0.0
    %669 = vmatpush1.msra.mxu0 0.0
    %670 = vmatprep.subr.mxu0 0.0
    %671 = vmatpush1.msra.mxu0 0.0
    %672 = vmatprep.subr.mxu0 0.0
    %673 = vmatpush1.msra.mxu0 0.0
    %674 = vmatprep.subr.mxu0 0.0
    %675 = vmatpush1.msra.mxu0 0.0
    %676 = vmatprep.subr.mxu0 0.0
    %677 = vmatpush1.msra.mxu0 0.0
    %678 = vmatprep.subr.mxu0 0.0
    %679 = vmatpush1.msra.mxu0 0.0
    %680 = vmatprep.subr.mxu0 0.0
    %681 = vmatpush1.msra.mxu0 0.0
    %682 = vmatprep.subr.mxu0 0.0
    %683 = vmatpush1.msra.mxu0 0.0
    %684 = vmatprep.subr.mxu0 0.0
    %685 = vmatpush1.msra.mxu0 0.0
    %686 = vmatprep.subr.mxu0 0.0
    %687 = vmatpush1.msra.mxu0 0.0
    %688 = vmatprep.subr.mxu0 0.0
    %689 = vmatpush1.msra.mxu0 0.0
    %690 = vmatprep.subr.mxu0 0.0
    %691 = vmatpush1.msra.mxu0 0.0
    %692 = vmatprep.subr.mxu0 0.0
    %693 = vmatpush1.msra.mxu0 0.0
    %694 = vmatprep.subr.mxu0 0.0
    %695 = vmatpush1.msra.mxu0 0.0
    %696 = vmatprep.subr.mxu0 0.0
    %697 = vmatpush1.msra.mxu0 0.0
    %698 = vmatprep.subr.mxu0 0.0
    %699 = vmatpush1.msra.mxu0 0.0
    %700 = vmatprep.subr.mxu0 0.0
    %701 = vmatpush1.msra.mxu0 0.0
    %702 = vmatprep.subr.mxu0 0.0
    %703 = vmatpush1.msra.mxu0 0.0
    %704 = vmatprep.subr.mxu0 0.0
    %705 = vmatpush1.msra.mxu0 0.0
    %706 = vmatprep.subr.mxu0 0.0
    %707 = vmatpush1.msra.mxu0 0.0
    %708 = vmatprep.mubr.f32.mxu0 0.0
    %709 = vmatmul.mubr.f32.gmra.mrb[0].mxu0 %v642
    %v710 = vpop.f32.mrb[0].mxu0
    %v711 = vadd.f32 %v272, %v710
    %v712 = vpop.f32.mrb[0].mxu0
    %v713 = vadd.f32 %v276, %v712
    %714 = vdwg.mxu0
    %v715 = vld [vmem:[#allocation2 + $0x18] sm:$0xff]
    %v716 = vadd.f32 %v711, %v715
    %v717 = vmul.f32 %v716, 0.5
    %v718 = vtanh.pop %v717
    %v719 = vadd.f32 %v718, 1.0
    %v720 = vmul.f32 %v719, 0.5
    %v721 = vtanh.pop %v716
    %v722 = vmul.f32 %v720, %v603
    %724 = vrot.lane.b32.xlu0 %v721, 64
    %v725 = vpop.permute.xlu0 %724
    %v727 = vmul.f32 %v720, %v725
    %729 = vrot.lane.b32.xlu0 %v727, 32
    %v730 = vpop.permute.xlu0 %729
    %v732 = vadd.f32 %v722, %v730
    %v733 = vtanh.pop %v732
    %735 = vrot.lane.b32.xlu0 %v733, 64
    %v736 = vpop.permute.xlu0 %735
    %v738 = vmul.f32 %v720, %v736
    %v739 = vmul.f32 %v713, 0.5
    %v740 = vtanh.pop %v739
    %v741 = vadd.f32 %v740, 1.0
    %v742 = vmul.f32 %v741, 0.5
    %v743 = vtanh.pop %v713
    %v744 = vmul.f32 %v742, %v625
    %746 = vrot.lane.b32.xlu0 %v743, 64
    %v747 = vpop.permute.xlu0 %746
    %v749 = vmul.f32 %v742, %v747
    %751 = vrot.lane.b32.xlu0 %v749, 32
    %v752 = vpop.permute.xlu0 %751
    %v754 = vadd.f32 %v744, %v752
    %v755 = vtanh.pop %v754
    %757 = vrot.lane.b32.xlu0 %v755, 64
    %v758 = vpop.permute.xlu0 %757
    %v760 = vmul.f32 %v742, %v758
    %762 = vrot.lane.b32.xlu0 %v738, 32
    %v763 = vpop.permute.xlu0 %762
    %766 = vrot.lane.b32.xlu0 %v760, 64
    %v767 = vpop.permute.xlu0 %766
    %v769 = vsel %vm381, %v763, %v767
    %v771 = vsel %vm279, %v769, 0
    %773 = vmatprep.subr.mxu0 %v252
    %774 = vmatpush1.msra.mxu0 %v251
    %775 = vmatprep.subr.mxu0 %v254
    %776 = vmatpush1.msra.mxu0 %v253
    %777 = vmatprep.subr.mxu0 %v256
    %778 = vmatpush1.msra.mxu0 %v255
    %779 = vmatprep.subr.mxu0 %v258
    %780 = vmatpush1.msra.mxu0 %v257
    %781 = vmatprep.subr.mxu0 %v260
    %782 = vmatpush1.msra.mxu0 %v259
    %783 = vmatprep.subr.mxu0 %v262
    %784 = vmatpush1.msra.mxu0 %v261
    %785 = vmatprep.subr.mxu0 %v264
    %786 = vmatpush1.msra.mxu0 %v263
    %787 = vmatprep.subr.mxu0 %v266
    %788 = vmatpush1.msra.mxu0 %v265
    %789 = vmatprep.subr.mxu0 0.0
    %790 = vmatpush1.msra.mxu0 0.0
    %791 = vmatprep.subr.mxu0 0.0
    %792 = vmatpush1.msra.mxu0 0.0
    %793 = vmatprep.subr.mxu0 0.0
    %794 = vmatpush1.msra.mxu0 0.0
    %795 = vmatprep.subr.mxu0 0.0
    %796 = vmatpush1.msra.mxu0 0.0
    %797 = vmatprep.subr.mxu0 0.0
    %798 = vmatpush1.msra.mxu0 0.0
    %799 = vmatprep.subr.mxu0 0.0
    %800 = vmatpush1.msra.mxu0 0.0
    %801 = vmatprep.subr.mxu0 0.0
    %802 = vmatpush1.msra.mxu0 0.0
    %803 = vmatprep.subr.mxu0 0.0
    %804 = vmatpush1.msra.mxu0 0.0
    %805 = vmatprep.subr.mxu0 0.0
    %806 = vmatpush1.msra.mxu0 0.0
    %807 = vmatprep.subr.mxu0 0.0
    %808 = vmatpush1.msra.mxu0 0.0
    %809 = vmatprep.subr.mxu0 0.0
    %810 = vmatpush1.msra.mxu0 0.0
    %811 = vmatprep.subr.mxu0 0.0
    %812 = vmatpush1.msra.mxu0 0.0
    %813 = vmatprep.subr.mxu0 0.0
    %814 = vmatpush1.msra.mxu0 0.0
    %815 = vmatprep.subr.mxu0 0.0
    %816 = vmatpush1.msra.mxu0 0.0
    %817 = vmatprep.subr.mxu0 0.0
    %818 = vmatpush1.msra.mxu0 0.0
    %819 = vmatprep.subr.mxu0 0.0
    %820 = vmatpush1.msra.mxu0 0.0
    %821 = vmatprep.subr.mxu0 0.0
    %822 = vmatpush1.msra.mxu0 0.0
    %823 = vmatprep.subr.mxu0 0.0
    %824 = vmatpush1.msra.mxu0 0.0
    %825 = vmatprep.subr.mxu0 0.0
    %826 = vmatpush1.msra.mxu0 0.0
    %827 = vmatprep.subr.mxu0 0.0
    %828 = vmatpush1.msra.mxu0 0.0
    %829 = vmatprep.subr.mxu0 0.0
    %830 = vmatpush1.msra.mxu0 0.0
    %831 = vmatprep.subr.mxu0 0.0
    %832 = vmatpush1.msra.mxu0 0.0
    %833 = vmatprep.subr.mxu0 0.0
    %834 = vmatpush1.msra.mxu0 0.0
    %835 = vmatprep.subr.mxu0 0.0
    %836 = vmatpush1.msra.mxu0 0.0
    %837 = vmatprep.mubr.f32.mxu0 0.0
    %838 = vmatmul.mubr.f32.gmra.mrb[0].mxu0 %v771
    %v839 = vpop.f32.mrb[0].mxu0
    %v840 = vadd.f32 %v272, %v839
    %v841 = vpop.f32.mrb[0].mxu0
    %v842 = vadd.f32 %v276, %v841
    %843 = vdwg.mxu0
    %v844 = vld [vmem:[#allocation2 + $0x20] sm:$0xff]
    %v845 = vadd.f32 %v840, %v844
    %v846 = vmul.f32 %v845, 0.5
    %v847 = vtanh.pop %v846
    %v848 = vadd.f32 %v847, 1.0
    %v849 = vmul.f32 %v848, 0.5
    %v850 = vtanh.pop %v845
    %v851 = vmul.f32 %v849, %v732
    %853 = vrot.lane.b32.xlu0 %v850, 64
    %v854 = vpop.permute.xlu0 %853
    %v856 = vmul.f32 %v849, %v854
    %858 = vrot.lane.b32.xlu0 %v856, 32
    %v859 = vpop.permute.xlu0 %858
    %v861 = vadd.f32 %v851, %v859
    %v862 = vtanh.pop %v861
    %864 = vrot.lane.b32.xlu0 %v862, 64
    %v865 = vpop.permute.xlu0 %864
    %v867 = vmul.f32 %v849, %v865
    %v868 = vmul.f32 %v842, 0.5
    %v869 = vtanh.pop %v868
    %v870 = vadd.f32 %v869, 1.0
    %v871 = vmul.f32 %v870, 0.5
    %v872 = vtanh.pop %v842
    %v873 = vmul.f32 %v871, %v754
    %875 = vrot.lane.b32.xlu0 %v872, 64
    %v876 = vpop.permute.xlu0 %875
    %v878 = vmul.f32 %v871, %v876
    %880 = vrot.lane.b32.xlu0 %v878, 32
    %v881 = vpop.permute.xlu0 %880
    %v883 = vadd.f32 %v873, %v881
    %v884 = vtanh.pop %v883
    %886 = vrot.lane.b32.xlu0 %v884, 64
    %v887 = vpop.permute.xlu0 %886
    %v889 = vmul.f32 %v871, %v887
    %891 = vrot.lane.b32.xlu0 %v867, 32
    %v892 = vpop.permute.xlu0 %891
    %895 = vrot.lane.b32.xlu0 %v889, 64
    %v896 = vpop.permute.xlu0 %895
    %v898 = vsel %vm381, %v892, %v896
    %v900 = vsel %vm279, %v898, 0
    %902 = vmatprep.subr.mxu0 %v252
    %903 = vmatpush1.msra.mxu0 %v251
    %904 = vmatprep.subr.mxu0 %v254
    %905 = vmatpush1.msra.mxu0 %v253
    %906 = vmatprep.subr.mxu0 %v256
    %907 = vmatpush1.msra.mxu0 %v255
    %908 = vmatprep.subr.mxu0 %v258
    %909 = vmatpush1.msra.mxu0 %v257
    %910 = vmatprep.subr.mxu0 %v260
    %911 = vmatpush1.msra.mxu0 %v259
    %912 = vmatprep.subr.mxu0 %v262
    %913 = vmatpush1.msra.mxu0 %v261
    %914 = vmatprep.subr.mxu0 %v264
    %915 = vmatpush1.msra.mxu0 %v263
    %916 = vmatprep.subr.mxu0 %v266
    %917 = vmatpush1.msra.mxu0 %v265
    %918 = vmatprep.subr.mxu0 0.0
    %919 = vmatpush1.msra.mxu0 0.0
    %920 = vmatprep.subr.mxu0 0.0
    %921 = vmatpush1.msra.mxu0 0.0
    %922 = vmatprep.subr.mxu0 0.0
    %923 = vmatpush1.msra.mxu0 0.0
    %924 = vmatprep.subr.mxu0 0.0
    %925 = vmatpush1.msra.mxu0 0.0
    %926 = vmatprep.subr.mxu0 0.0
    %927 = vmatpush1.msra.mxu0 0.0
    %928 = vmatprep.subr.mxu0 0.0
    %929 = vmatpush1.msra.mxu0 0.0
    %930 = vmatprep.subr.mxu0 0.0
    %931 = vmatpush1.msra.mxu0 0.0
    %932 = vmatprep.subr.mxu0 0.0
    %933 = vmatpush1.msra.mxu0 0.0
    %934 = vmatprep.subr.mxu0 0.0
    %935 = vmatpush1.msra.mxu0 0.0
    %936 = vmatprep.subr.mxu0 0.0
    %937 = vmatpush1.msra.mxu0 0.0
    %938 = vmatprep.subr.mxu0 0.0
    %939 = vmatpush1.msra.mxu0 0.0
    %940 = vmatprep.subr.mxu0 0.0
    %941 = vmatpush1.msra.mxu0 0.0
    %942 = vmatprep.subr.mxu0 0.0
    %943 = vmatpush1.msra.mxu0 0.0
    %944 = vmatprep.subr.mxu0 0.0
    %945 = vmatpush1.msra.mxu0 0.0
    %946 = vmatprep.subr.mxu0 0.0
    %947 = vmatpush1.msra.mxu0 0.0
    %948 = vmatprep.subr.mxu0 0.0
    %949 = vmatpush1.msra.mxu0 0.0
    %950 = vmatprep.subr.mxu0 0.0
    %951 = vmatpush1.msra.mxu0 0.0
    %952 = vmatprep.subr.mxu0 0.0
    %953 = vmatpush1.msra.mxu0 0.0
    %954 = vmatprep.subr.mxu0 0.0
    %955 = vmatpush1.msra.mxu0 0.0
    %956 = vmatprep.subr.mxu0 0.0
    %957 = vmatpush1.msra.mxu0 0.0
    %958 = vmatprep.subr.mxu0 0.0
    %959 = vmatpush1.msra.mxu0 0.0
    %960 = vmatprep.subr.mxu0 0.0
    %961 = vmatpush1.msra.mxu0 0.0
    %962 = vmatprep.subr.mxu0 0.0
    %963 = vmatpush1.msra.mxu0 0.0
    %964 = vmatprep.subr.mxu0 0.0
    %965 = vmatpush1.msra.mxu0 0.0
    %966 = vmatprep.mubr.f32.mxu0 0.0
    %967 = vmatmul.mubr.f32.gmra.mrb[0].mxu0 %v900
    %v968 = vpop.f32.mrb[0].mxu0
    %v969 = vadd.f32 %v272, %v968
    %v970 = vpop.f32.mrb[0].mxu0
    %v971 = vadd.f32 %v276, %v970
    %972 = vdwg.mxu0
    %v973 = vld [vmem:[#allocation2 + $0x28] sm:$0xff]
    %v974 = vadd.f32 %v969, %v973
    %v975 = vmul.f32 %v974, 0.5
    %v976 = vtanh.pop %v975
    %v977 = vadd.f32 %v976, 1.0
    %v978 = vmul.f32 %v977, 0.5
    %v979 = vtanh.pop %v974
    %v980 = vmul.f32 %v978, %v861
    %982 = vrot.lane.b32.xlu0 %v979, 64
    %v983 = vpop.permute.xlu0 %982
    %v985 = vmul.f32 %v978, %v983
    %987 = vrot.lane.b32.xlu0 %v985, 32
    %v988 = vpop.permute.xlu0 %987
    %v990 = vadd.f32 %v980, %v988
    %v991 = vtanh.pop %v990
    %993 = vrot.lane.b32.xlu0 %v991, 64
    %v994 = vpop.permute.xlu0 %993
    %v996 = vmul.f32 %v978, %v994
    %v997 = vmul.f32 %v971, 0.5
    %v998 = vtanh.pop %v997
    %v999 = vadd.f32 %v998, 1.0
    %v1000 = vmul.f32 %v999, 0.5
    %v1001 = vtanh.pop %v971
    %v1002 = vmul.f32 %v1000, %v883
    %1004 = vrot.lane.b32.xlu0 %v1001, 64
    %v1005 = vpop.permute.xlu0 %1004
    %v1007 = vmul.f32 %v1000, %v1005
    %1009 = vrot.lane.b32.xlu0 %v1007, 32
    %v1010 = vpop.permute.xlu0 %1009
    %v1012 = vadd.f32 %v1002, %v1010
    %v1013 = vtanh.pop %v1012
    %1015 = vrot.lane.b32.xlu0 %v1013, 64
    %v1016 = vpop.permute.xlu0 %1015
    %v1018 = vmul.f32 %v1000, %v1016
    %1020 = vrot.lane.b32.xlu0 %v996, 32
    %v1021 = vpop.permute.xlu0 %1020
    %1024 = vrot.lane.b32.xlu0 %v1018, 64
    %v1025 = vpop.permute.xlu0 %1024
    %v1027 = vsel %vm381, %v1021, %v1025
    %v1029 = vsel %vm279, %v1027, 0
    %1031 = vmatprep.subr.mxu0 %v252
    %1032 = vmatpush1.msra.mxu0 %v251
    %1033 = vmatprep.subr.mxu0 %v254
    %1034 = vmatpush1.msra.mxu0 %v253
    %1035 = vmatprep.subr.mxu0 %v256
    %1036 = vmatpush1.msra.mxu0 %v255
    %1037 = vmatprep.subr.mxu0 %v258
    %1038 = vmatpush1.msra.mxu0 %v257
    %1039 = vmatprep.subr.mxu0 %v260
    %1040 = vmatpush1.msra.mxu0 %v259
    %1041 = vmatprep.subr.mxu0 %v262
    %1042 = vmatpush1.msra.mxu0 %v261
    %1043 = vmatprep.subr.mxu0 %v264
    %1044 = vmatpush1.msra.mxu0 %v263
    %1045 = vmatprep.subr.mxu0 %v266
    %1046 = vmatpush1.msra.mxu0 %v265
    %1047 = vmatprep.subr.mxu0 0.0
    %1048 = vmatpush1.msra.mxu0 0.0
    %1049 = vmatprep.subr.mxu0 0.0
    %1050 = vmatpush1.msra.mxu0 0.0
    %1051 = vmatprep.subr.mxu0 0.0
    %1052 = vmatpush1.msra.mxu0 0.0
    %1053 = vmatprep.subr.mxu0 0.0
    %1054 = vmatpush1.msra.mxu0 0.0
    %1055 = vmatprep.subr.mxu0 0.0
    %1056 = vmatpush1.msra.mxu0 0.0
    %1057 = vmatprep.subr.mxu0 0.0
    %1058 = vmatpush1.msra.mxu0 0.0
    %1059 = vmatprep.subr.mxu0 0.0
    %1060 = vmatpush1.msra.mxu0 0.0
    %1061 = vmatprep.subr.mxu0 0.0
    %1062 = vmatpush1.msra.mxu0 0.0
    %1063 = vmatprep.subr.mxu0 0.0
    %1064 = vmatpush1.msra.mxu0 0.0
    %1065 = vmatprep.subr.mxu0 0.0
    %1066 = vmatpush1.msra.mxu0 0.0
    %1067 = vmatprep.subr.mxu0 0.0
    %1068 = vmatpush1.msra.mxu0 0.0
    %1069 = vmatprep.subr.mxu0 0.0
    %1070 = vmatpush1.msra.mxu0 0.0
    %1071 = vmatprep.subr.mxu0 0.0
    %1072 = vmatpush1.msra.mxu0 0.0
    %1073 = vmatprep.subr.mxu0 0.0
    %1074 = vmatpush1.msra.mxu0 0.0
    %1075 = vmatprep.subr.mxu0 0.0
    %1076 = vmatpush1.msra.mxu0 0.0
    %1077 = vmatprep.subr.mxu0 0.0
    %1078 = vmatpush1.msra.mxu0 0.0
    %1079 = vmatprep.subr.mxu0 0.0
    %1080 = vmatpush1.msra.mxu0 0.0
    %1081 = vmatprep.subr.mxu0 0.0
    %1082 = vmatpush1.msra.mxu0 0.0
    %1083 = vmatprep.subr.mxu0 0.0
    %1084 = vmatpush1.msra.mxu0 0.0
    %1085 = vmatprep.subr.mxu0 0.0
    %1086 = vmatpush1.msra.mxu0 0.0
    %1087 = vmatprep.subr.mxu0 0.0
    %1088 = vmatpush1.msra.mxu0 0.0
    %1089 = vmatprep.subr.mxu0 0.0
    %1090 = vmatpush1.msra.mxu0 0.0
    %1091 = vmatprep.subr.mxu0 0.0
    %1092 = vmatpush1.msra.mxu0 0.0
    %1093 = vmatprep.subr.mxu0 0.0
    %1094 = vmatpush1.msra.mxu0 0.0
    %1095 = vmatprep.mubr.f32.mxu0 0.0
    %1096 = vmatmul.mubr.f32.gmra.mrb[0].mxu0 %v1029
    %v1097 = vpop.f32.mrb[0].mxu0
    %v1098 = vadd.f32 %v272, %v1097
    %v1099 = vpop.f32.mrb[0].mxu0
    %v1100 = vadd.f32 %v276, %v1099
    %1101 = vdwg.mxu0
    %v1102 = vld [vmem:[#allocation2 + $0x30] sm:$0xff]
    %v1103 = vadd.f32 %v1098, %v1102
    %v1104 = vmul.f32 %v1103, 0.5
    %v1105 = vtanh.pop %v1104
    %v1106 = vadd.f32 %v1105, 1.0
    %v1107 = vmul.f32 %v1106, 0.5
    %v1108 = vtanh.pop %v1103
    %v1109 = vmul.f32 %v1107, %v990
    %1111 = vrot.lane.b32.xlu0 %v1108, 64
    %v1112 = vpop.permute.xlu0 %1111
    %v1114 = vmul.f32 %v1107, %v1112
    %1116 = vrot.lane.b32.xlu0 %v1114, 32
    %v1117 = vpop.permute.xlu0 %1116
    %v1119 = vadd.f32 %v1109, %v1117
    %v1120 = vtanh.pop %v1119
    %1122 = vrot.lane.b32.xlu0 %v1120, 64
    %v1123 = vpop.permute.xlu0 %1122
    %v1125 = vmul.f32 %v1107, %v1123
    %v1126 = vmul.f32 %v1100, 0.5
    %v1127 = vtanh.pop %v1126
    %v1128 = vadd.f32 %v1127, 1.0
    %v1129 = vmul.f32 %v1128, 0.5
    %v1130 = vtanh.pop %v1100
    %v1131 = vmul.f32 %v1129, %v1012
    %1133 = vrot.lane.b32.xlu0 %v1130, 64
    %v1134 = vpop.permute.xlu0 %1133
    %v1136 = vmul.f32 %v1129, %v1134
    %1138 = vrot.lane.b32.xlu0 %v1136, 32
    %v1139 = vpop.permute.xlu0 %1138
    %v1141 = vadd.f32 %v1131, %v1139
    %v1142 = vtanh.pop %v1141
    %1144 = vrot.lane.b32.xlu0 %v1142, 64
    %v1145 = vpop.permute.xlu0 %1144
    %v1147 = vmul.f32 %v1129, %v1145
    %1149 = vrot.lane.b32.xlu0 %v1125, 32
    %v1150 = vpop.permute.xlu0 %1149
    %1153 = vrot.lane.b32.xlu0 %v1147, 64
    %v1154 = vpop.permute.xlu0 %1153
    %v1156 = vsel %vm381, %v1150, %v1154
    %v1158 = vsel %vm279, %v1156, 0
    %1160 = vmatprep.subr.mxu0 %v252
    %1161 = vmatpush1.msra.mxu0 %v251
    %1162 = vmatprep.subr.mxu0 %v254
    %1163 = vmatpush1.msra.mxu0 %v253
    %1164 = vmatprep.subr.mxu0 %v256
    %1165 = vmatpush1.msra.mxu0 %v255
    %1166 = vmatprep.subr.mxu0 %v258
    %1167 = vmatpush1.msra.mxu0 %v257
    %1168 = vmatprep.subr.mxu0 %v260
    %1169 = vmatpush1.msra.mxu0 %v259
    %1170 = vmatprep.subr.mxu0 %v262
    %1171 = vmatpush1.msra.mxu0 %v261
    %1172 = vmatprep.subr.mxu0 %v264
    %1173 = vmatpush1.msra.mxu0 %v263
    %1174 = vmatprep.subr.mxu0 %v266
    %1175 = vmatpush1.msra.mxu0 %v265
    %1176 = vmatprep.subr.mxu0 0.0
    %1177 = vmatpush1.msra.mxu0 0.0
    %1178 = vmatprep.subr.mxu0 0.0
    %1179 = vmatpush1.msra.mxu0 0.0
    %1180 = vmatprep.subr.mxu0 0.0
    %1181 = vmatpush1.msra.mxu0 0.0
    %1182 = vmatprep.subr.mxu0 0.0
    %1183 = vmatpush1.msra.mxu0 0.0
    %1184 = vmatprep.subr.mxu0 0.0
    %1185 = vmatpush1.msra.mxu0 0.0
    %1186 = vmatprep.subr.mxu0 0.0
    %1187 = vmatpush1.msra.mxu0 0.0
    %1188 = vmatprep.subr.mxu0 0.0
    %1189 = vmatpush1.msra.mxu0 0.0
    %1190 = vmatprep.subr.mxu0 0.0
    %1191 = vmatpush1.msra.mxu0 0.0
    %1192 = vmatprep.subr.mxu0 0.0
    %1193 = vmatpush1.msra.mxu0 0.0
    %1194 = vmatprep.subr.mxu0 0.0
    %1195 = vmatpush1.msra.mxu0 0.0
    %1196 = vmatprep.subr.mxu0 0.0
    %1197 = vmatpush1.msra.mxu0 0.0
    %1198 = vmatprep.subr.mxu0 0.0
    %1199 = vmatpush1.msra.mxu0 0.0
    %1200 = vmatprep.subr.mxu0 0.0
    %1201 = vmatpush1.msra.mxu0 0.0
    %1202 = vmatprep.subr.mxu0 0.0
    %1203 = vmatpush1.msra.mxu0 0.0
    %1204 = vmatprep.subr.mxu0 0.0
    %1205 = vmatpush1.msra.mxu0 0.0
    %1206 = vmatprep.subr.mxu0 0.0
    %1207 = vmatpush1.msra.mxu0 0.0
    %1208 = vmatprep.subr.mxu0 0.0
    %1209 = vmatpush1.msra.mxu0 0.0
    %1210 = vmatprep.subr.mxu0 0.0
    %1211 = vmatpush1.msra.mxu0 0.0
    %1212 = vmatprep.subr.mxu0 0.0
    %1213 = vmatpush1.msra.mxu0 0.0
    %1214 = vmatprep.subr.mxu0 0.0
    %1215 = vmatpush1.msra.mxu0 0.0
    %1216 = vmatprep.subr.mxu0 0.0
    %1217 = vmatpush1.msra.mxu0 0.0
    %1218 = vmatprep.subr.mxu0 0.0
    %1219 = vmatpush1.msra.mxu0 0.0
    %1220 = vmatprep.subr.mxu0 0.0
    %1221 = vmatpush1.msra.mxu0 0.0
    %1222 = vmatprep.subr.mxu0 0.0
    %1223 = vmatpush1.msra.mxu0 0.0
    %1224 = vmatprep.mubr.f32.mxu0 0.0
    %1225 = vmatmul.mubr.f32.gmra.mrb[0].mxu0 %v1158
    %v1226 = vpop.f32.mrb[0].mxu0
    %v1227 = vadd.f32 %v272, %v1226
    %v1228 = vpop.f32.mrb[0].mxu0
    %v1229 = vadd.f32 %v276, %v1228
    %1230 = vdwg.mxu0
    %v1231 = vld [vmem:[#allocation2 + $0x38] sm:$0xff]
    %v1232 = vadd.f32 %v1227, %v1231
    %v1233 = vmul.f32 %v1232, 0.5
    %v1234 = vtanh.pop %v1233
    %v1235 = vadd.f32 %v1234, 1.0
    %v1236 = vmul.f32 %v1235, 0.5
    %v1237 = vtanh.pop %v1232
    %v1238 = vmul.f32 %v1236, %v1119
    %1240 = vrot.lane.b32.xlu0 %v1237, 64
    %v1241 = vpop.permute.xlu0 %1240
    %v1243 = vmul.f32 %v1236, %v1241
    %1245 = vrot.lane.b32.xlu0 %v1243, 32
    %v1246 = vpop.permute.xlu0 %1245
    %v1248 = vadd.f32 %v1238, %v1246
    %v1249 = vtanh.pop %v1248
    %1251 = vrot.lane.b32.xlu0 %v1249, 64
    %v1252 = vpop.permute.xlu0 %1251
    %v1254 = vmul.f32 %v1236, %v1252
    %v1255 = vmul.f32 %v1229, 0.5
    %v1256 = vtanh.pop %v1255
    %v1257 = vadd.f32 %v1256, 1.0
    %v1258 = vmul.f32 %v1257, 0.5
    %v1259 = vtanh.pop %v1229
    %v1260 = vmul.f32 %v1258, %v1141
    %1262 = vrot.lane.b32.xlu0 %v1259, 64
    %v1263 = vpop.permute.xlu0 %1262
    %v1265 = vmul.f32 %v1258, %v1263
    %1267 = vrot.lane.b32.xlu0 %v1265, 32
    %v1268 = vpop.permute.xlu0 %1267
    %v1270 = vadd.f32 %v1260, %v1268
    %v1271 = vtanh.pop %v1270
    %1273 = vrot.lane.b32.xlu0 %v1271, 64
    %v1274 = vpop.permute.xlu0 %1273
    %v1276 = vmul.f32 %v1258, %v1274
    %1278 = vrot.lane.b32.xlu0 %v1254, 32
    %v1279 = vpop.permute.xlu0 %1278
    %1282 = vrot.lane.b32.xlu0 %v1276, 64
    %v1283 = vpop.permute.xlu0 %1282
    %v1285 = vsel %vm381, %v1279, %v1283
    %v1287 = vsel %vm279, %v1285, 0
    %1289 = vmatprep.subr.mxu0 %v252
    %1290 = vmatpush1.msra.mxu0 %v251
    %1291 = vmatprep.subr.mxu0 %v254
    %1292 = vmatpush1.msra.mxu0 %v253
    %1293 = vmatprep.subr.mxu0 %v256
    %1294 = vmatpush1.msra.mxu0 %v255
    %1295 = vmatprep.subr.mxu0 %v258
    %1296 = vmatpush1.msra.mxu0 %v257
    %1297 = vmatprep.subr.mxu0 %v260
    %1298 = vmatpush1.msra.mxu0 %v259
    %1299 = vmatprep.subr.mxu0 %v262
    %1300 = vmatpush1.msra.mxu0 %v261
    %1301 = vmatprep.subr.mxu0 %v264
    %1302 = vmatpush1.msra.mxu0 %v263
    %1303 = vmatprep.subr.mxu0 %v266
    %1304 = vmatpush1.msra.mxu0 %v265
    %1305 = vmatprep.subr.mxu0 0.0
    %1306 = vmatpush1.msra.mxu0 0.0
    %1307 = vmatprep.subr.mxu0 0.0
    %1308 = vmatpush1.msra.mxu0 0.0
    %1309 = vmatprep.subr.mxu0 0.0
    %1310 = vmatpush1.msra.mxu0 0.0
    %1311 = vmatprep.subr.mxu0 0.0
    %1312 = vmatpush1.msra.mxu0 0.0
    %1313 = vmatprep.subr.mxu0 0.0
    %1314 = vmatpush1.msra.mxu0 0.0
    %1315 = vmatprep.subr.mxu0 0.0
    %1316 = vmatpush1.msra.mxu0 0.0
    %1317 = vmatprep.subr.mxu0 0.0
    %1318 = vmatpush1.msra.mxu0 0.0
    %1319 = vmatprep.subr.mxu0 0.0
    %1320 = vmatpush1.msra.mxu0 0.0
    %1321 = vmatprep.subr.mxu0 0.0
    %1322 = vmatpush1.msra.mxu0 0.0
    %1323 = vmatprep.subr.mxu0 0.0
    %1324 = vmatpush1.msra.mxu0 0.0
    %1325 = vmatprep.subr.mxu0 0.0
    %1326 = vmatpush1.msra.mxu0 0.0
    %1327 = vmatprep.subr.mxu0 0.0
    %1328 = vmatpush1.msra.mxu0 0.0
    %1329 = vmatprep.subr.mxu0 0.0
    %1330 = vmatpush1.msra.mxu0 0.0
    %1331 = vmatprep.subr.mxu0 0.0
    %1332 = vmatpush1.msra.mxu0 0.0
    %1333 = vmatprep.subr.mxu0 0.0
    %1334 = vmatpush1.msra.mxu0 0.0
    %1335 = vmatprep.subr.mxu0 0.0
    %1336 = vmatpush1.msra.mxu0 0.0
    %1337 = vmatprep.subr.mxu0 0.0
    %1338 = vmatpush1.msra.mxu0 0.0
    %1339 = vmatprep.subr.mxu0 0.0
    %1340 = vmatpush1.msra.mxu0 0.0
    %1341 = vmatprep.subr.mxu0 0.0
    %1342 = vmatpush1.msra.mxu0 0.0
    %1343 = vmatprep.subr.mxu0 0.0
    %1344 = vmatpush1.msra.mxu0 0.0
    %1345 = vmatprep.subr.mxu0 0.0
    %1346 = vmatpush1.msra.mxu0 0.0
    %1347 = vmatprep.subr.mxu0 0.0
    %1348 = vmatpush1.msra.mxu0 0.0
    %1349 = vmatprep.subr.mxu0 0.0
    %1350 = vmatpush1.msra.mxu0 0.0
    %1351 = vmatprep.subr.mxu0 0.0
    %1352 = vmatpush1.msra.mxu0 0.0
    %1353 = vmatprep.mubr.f32.mxu0 0.0
    %1354 = vmatmul.mubr.f32.gmra.mrb[0].mxu0 %v1287
    %v1355 = vpop.f32.mrb[0].mxu0
    %v1356 = vpop.f32.mrb[0].mxu0
    %v1357 = vadd.f32 %v276, %v1356
    %1358 = vdwg.mxu0
    %v1359 = vmul.f32 %v1357, 0.5
    %v1360 = vtanh.pop %v1359
    %v1361 = vadd.f32 %v1360, 1.0
    %v1362 = vmul.f32 %v1361, 0.5
    %v1363 = vtanh.pop %v1357
    %v1364 = vmul.f32 %v1362, %v1270
    %1366 = vrot.lane.b32.xlu0 %v1363, 64
    %v1367 = vpop.permute.xlu0 %1366
    %v1369 = vmul.f32 %v1362, %v1367
    %1371 = vrot.lane.b32.xlu0 %v1369, 32
    %v1372 = vpop.permute.xlu0 %1371
    %v1374 = vadd.f32 %v1364, %v1372
    %v1375 = vtanh.pop %v1374
    %1377 = vrot.lane.b32.xlu0 %v1375, 64
    %v1378 = vpop.permute.xlu0 %1377
    %v1380 = vmul.f32 %v1362, %v1378
    %v1381 = vld [vmem:[#allocation11] sm:$0xff]
    %v1382 = vld [vmem:[#allocation11 + $0x8] sm:$0xff]
    %v1383 = vld [vmem:[#allocation11 + $0x10] sm:$0xff]
    %v1384 = vld [vmem:[#allocation11 + $0x18] sm:$0xff]
    %v1385 = vld [vmem:[#allocation12] sm:$0x1]
    %v1387 = vlaneseq
    %v1388 = vshrl.u32 %v1387, 7
    %v1389 = vsub.s32 0, %v1388
    %v1390 = vrot.slane %v1385, %v1389
    %1393 = vrot.lane.b32.xlu0 %v1380, 32
    %v1394 = vpop.permute.xlu0 %1393
    %v1395 = vsel %vm381, %v1394, 0
    %1397 = vmatprep.subr.mxu0 0.0
    %1398 = vmatpush1.msra.mxu0 %v1381
    %1399 = vmatprep.subr.mxu0 0.0
    %1400 = vmatpush1.msra.mxu0 %v1382
    %1401 = vmatprep.subr.mxu0 0.0
    %1402 = vmatpush1.msra.mxu0 %v1383
    %1403 = vmatprep.subr.mxu0 0.0
    %1404 = vmatpush1.msra.mxu0 %v1384
    %1405 = vmatprep.subr.mxu0 0.0
    %1406 = vmatpush1.msra.mxu0 0.0
    %1407 = vmatprep.subr.mxu0 0.0
    %1408 = vmatpush1.msra.mxu0 0.0
    %1409 = vmatprep.subr.mxu0 0.0
    %1410 = vmatpush1.msra.mxu0 0.0
    %1411 = vmatprep.subr.mxu0 0.0
    %1412 = vmatpush1.msra.mxu0 0.0
    %1413 = vmatprep.subr.mxu0 0.0
    %1414 = vmatpush1.msra.mxu0 0.0
    %1415 = vmatprep.subr.mxu0 0.0
    %1416 = vmatpush1.msra.mxu0 0.0
    %1417 = vmatprep.subr.mxu0 0.0
    %1418 = vmatpush1.msra.mxu0 0.0
    %1419 = vmatprep.subr.mxu0 0.0
    %1420 = vmatpush1.msra.mxu0 0.0
    %1421 = vmatprep.subr.mxu0 0.0
    %1422 = vmatpush1.msra.mxu0 0.0
    %1423 = vmatprep.subr.mxu0 0.0
    %1424 = vmatpush1.msra.mxu0 0.0
    %1425 = vmatprep.subr.mxu0 0.0
    %1426 = vmatpush1.msra.mxu0 0.0
    %1427 = vmatprep.subr.mxu0 0.0
    %1428 = vmatpush1.msra.mxu0 0.0
    %1429 = vmatprep.subr.mxu0 0.0
    %1430 = vmatpush1.msra.mxu0 0.0
    %1431 = vmatprep.subr.mxu0 0.0
    %1432 = vmatpush1.msra.mxu0 0.0
    %1433 = vmatprep.subr.mxu0 0.0
    %1434 = vmatpush1.msra.mxu0 0.0
    %1435 = vmatprep.subr.mxu0 0.0
    %1436 = vmatpush1.msra.mxu0 0.0
    %1437 = vmatprep.subr.mxu0 0.0
    %1438 = vmatpush1.msra.mxu0 0.0
    %1439 = vmatprep.subr.mxu0 0.0
    %1440 = vmatpush1.msra.mxu0 0.0
    %1441 = vmatprep.subr.mxu0 0.0
    %1442 = vmatpush1.msra.mxu0 0.0
    %1443 = vmatprep.subr.mxu0 0.0
    %1444 = vmatpush1.msra.mxu0 0.0
    %1445 = vmatprep.subr.mxu0 0.0
    %1446 = vmatpush1.msra.mxu0 0.0
    %1447 = vmatprep.subr.mxu0 0.0
    %1448 = vmatpush1.msra.mxu0 0.0
    %1449 = vmatprep.subr.mxu0 0.0
    %1450 = vmatpush1.msra.mxu0 0.0
    %1451 = vmatprep.subr.mxu0 0.0
    %1452 = vmatpush1.msra.mxu0 0.0
    %1453 = vmatprep.subr.mxu0 0.0
    %1454 = vmatpush1.msra.mxu0 0.0
    %1455 = vmatprep.subr.mxu0 0.0
    %1456 = vmatpush1.msra.mxu0 0.0
    %1457 = vmatprep.subr.mxu0 0.0
    %1458 = vmatpush1.msra.mxu0 0.0
    %1459 = vmatprep.subr.mxu0 0.0
    %1460 = vmatpush1.msra.mxu0 0.0
    %1461 = vmatprep.mubr.f32.mxu0 0.0
    %1462 = vmatmul.mubr.f32.gmra.mrb[0].mxu0 %v1395
    %v1463 = vpop.f32.mrb[0].mxu0
    %v1464 = vadd.f32 %v1390, %v1463
    %v1465 = vpop.f32.mrb[0].mxu0
    %1466 = vdwg.mxu0
    %1467 = vst [vmem:[#allocation14] sm:$0xff] %v1464
    // Predicated region
    $region50: #{lstm_forward.1} parent=1 // pred_check
      _
    $region51: #{lstm_forward.1} parent=1 // pred_check_branch
      %1469 = sbr.rel (0) target = $region53
    $region52: #{lstm_forward.1} parent=1 // pred_region
      %s1471 = ssub.s32 128, 128
      %1472 = vsyncadd [#allocation5], %s1471
      %s1474 = sshll.u32 [#allocation14], 4
      %s1475 = int_to_ptr.vmem [resolvable:$true] %s1474
      %1477 = dma.vmem_to_hbm [thread:$0]  %s1475, 128, %s6, [#allocation5]
    $region53: #{lstm_forward.1} parent=1 // pred_fallthru
      _
    // Predicated region
    $region54: #{lstm_forward.1} parent=1 // pred_check
      _
    $region55: #{lstm_forward.1} parent=1 // pred_check_branch
      %1479 = sbr.rel (0) target = $region57
    $region56: #{lstm_forward.1} parent=1 // pred_region
      %1480 = dma.done [#allocation5], 128
    $region57: #{lstm_forward.1} parent=1 // pred_fallthru
      _
    %1481 = vsyncpa [#allocation4], 1
    %1482 = vsyncpa [#allocation7], 1
    %1483 = vsyncpa [#allocation10], 1
    %1484 = vsyncpa [#allocation13], 1
    %1485 = vsyncpa [#allocation5], 1

</llo_original>
